<compile_context>
chip_gen: v7x
topology: tpu7x:2x2x1
jax: 0.10.0
libtpu: 0.0.40
codegen_flags: <defaults>
</compile_context>

<pallas_src>
import functools

import jax
import jax.numpy as jnp
import numpy as np
from jax import lax
from jax.experimental import pallas as pl
from jax.experimental.pallas import tpu as pltpu


def _rnn_kernel(x_ref, wih_ref, whh_ref, o_ref, h_scr, xw_scr, *,
                t_chunk, batch, seq_len):
    """One grid step == one chunk of up to t_chunk timesteps."""
    g = pl.program_id(0)

    # Zero-init hidden state at the first chunk (matches torch.zeros(...)).
    @pl.when(g == 0)
    def _():
        h_scr[...] = jnp.zeros_like(h_scr)

    # Fused input projection for the whole chunk: one MXU matmul whose row
    # dimension (t_chunk * batch) is sized to fill the MXU.  Result parked in
    # VMEM scratch so it does not stay live in vregs across the recurrence.
    xw = jnp.dot(x_ref[...], wih_ref[...],
                 preferred_element_type=jnp.float32)        # (t_chunk*B, Hp) f32
    xw_scr[...] = xw.reshape(t_chunk, batch, xw.shape[-1])

    whh = whh_ref[...]                                      # (Hp, Hp), resident
    t0 = g * t_chunk

    def step(s, h):
        xp = xw_scr[s]                                      # one vld per step
        hh = jnp.dot(h.astype(whh.dtype), whh,
                     preferred_element_type=jnp.float32)    # (B, Hp) f32
        h_new = jnp.tanh(xp + hh)
        # Tail guard: timesteps past the true sequence length leave h unchanged
        # (zero-padding T would be wrong: tanh(h @ W_hh) != h).
        return jnp.where(t0 + s < seq_len, h_new, h)

    h = lax.fori_loop(0, t_chunk, step, h_scr[...], unroll=True)
    h_scr[...] = h

    # Only the last grid step writes the (lane-dense) output block.
    @pl.when(g == pl.num_programs(0) - 1)
    def _():
        o_ref[...] = h


def _round_up(x, m):
    return (x + m - 1) // m * m


def _pick_chunk(T, Bp, *, row_target=256, max_unroll=32, min_chunk=8):
    """Timesteps per grid step.

    Large enough that the fused projection's row dim (t_chunk*Bp) reaches the
    MXU row target (256 on v6e/v7x) and grid-step overhead is amortized, but
    capped by a static-unroll budget and the sequence length.
    """
    c = max(min_chunk, -(-row_target // Bp))
    return max(1, min(c, max_unroll, T))


def _build_rnn_call(seq_len, Bp, Hp, I, t_chunk, grid_len, single_buffer_weights):
    if single_buffer_weights:
        # Weights have constant index maps; single-buffering halves their VMEM
        # footprint (important at production H, esp. on v7x's 64 MiB VMEM).
        def weight_spec(shape):
            return pl.BlockSpec(shape, lambda g: (0, 0),
                                pipeline_mode=pl.Buffered(1))
    else:
        def weight_spec(shape):
            return pl.BlockSpec(shape, lambda g: (0, 0))

    kernel = functools.partial(_rnn_kernel, t_chunk=t_chunk, batch=Bp,
                               seq_len=seq_len)
    return pl.pallas_call(
        kernel,
        out_shape=jax.ShapeDtypeStruct((Bp, Hp), jnp.float32),
        grid_spec=pltpu.PrefetchScalarGridSpec(
            num_scalar_prefetch=0,
            grid=(grid_len,),
            in_specs=[
                pl.BlockSpec((t_chunk * Bp, I), lambda g: (g, 0)),  # x chunk
                weight_spec((I, Hp)),                               # W_ih
                weight_spec((Hp, Hp)),                              # W_hh
            ],
            out_specs=pl.BlockSpec((Bp, Hp), lambda g: (0, 0)),
            scratch_shapes=[
                pltpu.VMEM((Bp, Hp), jnp.float32),            # hidden state
                pltpu.VMEM((t_chunk, Bp, Hp), jnp.float32),   # chunk projection
            ],
        ),
        compiler_params=pltpu.CompilerParams(
            # The time recurrence is inherently sequential.
            dimension_semantics=("arbitrary",)),
    )


def single_layer_rnn_forward(x, w_ih, w_hh, *, matmul_dtype=jnp.float32,
                             t_chunk=None):
    """x: (T, B, I); w_ih: (I, H); w_hh: (H, H).  Returns final h: (B, H) f32."""
    T, B, I = x.shape
    H = w_hh.shape[0]
    assert w_ih.shape == (I, H)

    Bp = _round_up(B, 8)        # sublane alignment
    Hp = _round_up(H, 128)      # lane alignment

    # Zero padding of B/H is mathematically exact (tanh(0) = 0, and padded
    # weight rows/cols are 0 so padded h columns stay 0 and never feed back).
    # Matmul operands are optionally cast to bf16 (accumulation stays f32).
    x_p = jnp.zeros((T, Bp, I), matmul_dtype).at[:, :B, :].set(
        x.astype(matmul_dtype))
    x2d = x_p.reshape(T * Bp, I)
    wih_p = jnp.zeros((I, Hp), matmul_dtype).at[:, :H].set(
        w_ih.astype(matmul_dtype))
    whh_p = jnp.zeros((Hp, Hp), matmul_dtype).at[:H, :H].set(
        w_hh.astype(matmul_dtype))

    if t_chunk is None:
        t_chunk = _pick_chunk(T, Bp)
    grid_len = pl.cdiv(T, t_chunk)

    out = None
    for single_buffer in (True, False):
        try:
            call = _build_rnn_call(T, Bp, Hp, I, t_chunk, grid_len, single_buffer)
            out = jax.block_until_ready(call(x2d, wih_p, whh_p))
            break
        except Exception:
            # Fall back to default (double-buffered) weight specs if this JAX
            # build rejects pipeline_mode=pl.Buffered(1); re-raise otherwise.
            if not single_buffer:
                raise
    return out[:B, :H]


# ----------------------------- pure-JAX reference ----------------------------

def rnn_reference(x, w_ih, w_hh):
    T, B, _ = x.shape
    H = w_hh.shape[0]
    h = jnp.zeros((B, H), jnp.float32)
    for t in range(T):
        h = jnp.tanh(
            jnp.dot(x[t], w_ih, precision=lax.Precision.HIGHEST)
            + jnp.dot(h, w_hh, precision=lax.Precision.HIGHEST))
    return h


if __name__ == "__main__":
    seq_len, batch, input_size, hidden_size = 8, 8, 16, 32

    key = jax.random.PRNGKey(0)
    kx, kih, khh = jax.random.split(key, 3)
    x = jax.random.normal(kx, (seq_len, batch, input_size), jnp.float32)
    # Matches torch.randn initialization of the module parameters.
    w_ih = jax.random.normal(kih, (input_size, hidden_size), jnp.float32)
    w_hh = jax.random.normal(khh, (hidden_size, hidden_size), jnp.float32)

    ref = rnn_reference(x, w_ih, w_hh)

    # 1) Default config: whole sequence projected + recurred in one grid step.
    out = jax.block_until_ready(single_layer_rnn_forward(x, w_ih, w_hh))
    np.testing.assert_allclose(np.asarray(out), np.asarray(ref),
                               rtol=2e-2, atol=2e-2)

    # 2) Forced small chunk: exercises the cdiv grid, h persistence across grid
    #    steps, and the in-kernel tail guard (last chunk has a masked step).
    out_tail = jax.block_until_ready(
        single_layer_rnn_forward(x, w_ih, w_hh, t_chunk=3))
    np.testing.assert_allclose(np.asarray(out_tail), np.asarray(ref),
                               rtol=2e-2, atol=2e-2)

    # 3) bf16 matmul-operand fast path (v6e/v7x MXU); accumulation stays f32.
    #    Run to show the path compiles/executes; not asserted against f32 ref.
    out_bf16 = jax.block_until_ready(
        single_layer_rnn_forward(x, w_ih, w_hh, matmul_dtype=jnp.bfloat16))
    assert out_bf16.shape == (batch, hidden_size)

    print("KERNEL_OK")
</pallas_src>

<mosaic_0001>
module attributes {stable_mosaic.version = 11 : i64} {
  func.func @_rnn_kernel(%arg0: i32, %arg1: memref<64x16xf32, #tpu.memory_space<vmem>>, %arg2: memref<16x128xf32, #tpu.memory_space<vmem>>, %arg3: memref<128x128xf32, #tpu.memory_space<vmem>>, %arg4: memref<8x128xf32, #tpu.memory_space<vmem>>, %arg5: memref<8x128xf32, #tpu.memory_space<vmem>>, %arg6: memref<8x8x128xf32, #tpu.memory_space<vmem>>) attributes {dimension_semantics = [#tpu.dimension_semantics<arbitrary>], iteration_bounds = array<i64: 1>, scalar_prefetch = 0 : i64, scratch_operands = 2 : i64, tpu.core_type = #tpu.core_type<tc>, window_params = [{transform_indices = @transform_0, window_bounds = array<i64: 64, 16>}, {pipeline_mode = #tpu.pipeline_mode<synchronous>, transform_indices = @transform_1, window_bounds = array<i64: 16, 128>}, {pipeline_mode = #tpu.pipeline_mode<synchronous>, transform_indices = @transform_2, window_bounds = array<i64: 128, 128>}, {pipeline_mode = #tpu.pipeline_mode<synchronous>, transform_indices = @transform_3, window_bounds = array<i64: 8, 128>}]} {
    %c0_i32 = arith.constant 0 : i32
    %0 = arith.cmpi eq, %arg0, %c0_i32 : i32
    %1 = arith.extui %0 : i1 to i32
    %c0_i32_0 = arith.constant 0 : i32
    %2 = arith.cmpi ne, %1, %c0_i32_0 : i32
    scf.if %2 {
      %cst_49 = arith.constant 0.000000e+00 : f32
      %87 = vector.broadcast %cst_49 : f32 to vector<8x128xf32>
      %c0_50 = arith.constant 0 : index
      %c0_51 = arith.constant 0 : index
      %88 = vector.load %arg5[%c0_50, %c0_51] : memref<8x128xf32, #tpu.memory_space<vmem>>, vector<8x128xf32>
      tpu.vector_store %arg5[%c0_50, %c0_51], %87 {strides = array<i32>} : memref<8x128xf32, #tpu.memory_space<vmem>>, vector<8x128xf32>,
    } else {
    }
    %c0 = arith.constant 0 : index
    %c0_1 = arith.constant 0 : index
    %3 = vector.load %arg1[%c0, %c0_1] : memref<64x16xf32, #tpu.memory_space<vmem>>, vector<64x16xf32>
    %c0_2 = arith.constant 0 : index
    %c0_3 = arith.constant 0 : index
    %4 = vector.load %arg2[%c0_2, %c0_3] : memref<16x128xf32, #tpu.memory_space<vmem>>, vector<16x128xf32>
    %cst = arith.constant dense<0.000000e+00> : vector<64x128xf32>
    %5 = tpu.matmul %3, %4, %cst {dimension_numbers = #tpu.dot_dimension_numbers<[1], [0], [0], [1], [0, 0, 1, 1], [], []>} : vector<64x16xf32>, vector<16x128xf32>, vector<64x128xf32> -> vector<64x128xf32>
    %6 = vector.shape_cast %5 : vector<64x128xf32> to vector<8x8x128xf32>
    %c0_4 = arith.constant 0 : index
    %c0_5 = arith.constant 0 : index
    %c0_6 = arith.constant 0 : index
    %7 = vector.load %arg6[%c0_4, %c0_5, %c0_6] : memref<8x8x128xf32, #tpu.memory_space<vmem>>, vector<8x8x128xf32>
    tpu.vector_store %arg6[%c0_4, %c0_5, %c0_6], %6 {strides = array<i32>} : memref<8x8x128xf32, #tpu.memory_space<vmem>>, vector<8x8x128xf32>,
    %c0_7 = arith.constant 0 : index
    %c0_8 = arith.constant 0 : index
    %8 = vector.load %arg3[%c0_7, %c0_8] : memref<128x128xf32, #tpu.memory_space<vmem>>, vector<128x128xf32>
    %c8_i32 = arith.constant 8 : i32
    %9 = arith.muli %arg0, %c8_i32 : i32
    %c0_9 = arith.constant 0 : index
    %c0_10 = arith.constant 0 : index
    %10 = vector.load %arg5[%c0_9, %c0_10] : memref<8x128xf32, #tpu.memory_space<vmem>>, vector<8x128xf32>
    %c0_i32_11 = arith.constant 0 : i32
    %11 = arith.index_cast %c0_i32_11 : i32 to index
    %c0_12 = arith.constant 0 : index
    %c0_13 = arith.constant 0 : index
    %12 = vector.load %arg6[%11, %c0_12, %c0_13] : memref<8x8x128xf32, #tpu.memory_space<vmem>>, vector<1x8x128xf32>
    %13 = vector.shape_cast %12 : vector<1x8x128xf32> to vector<8x128xf32>
    %cst_14 = arith.constant dense<0.000000e+00> : vector<8x128xf32>
    %14 = tpu.matmul %10, %8, %cst_14 {dimension_numbers = #tpu.dot_dimension_numbers<[1], [0], [0], [1], [0, 0, 1, 1], [], []>} : vector<8x128xf32>, vector<128x128xf32>, vector<8x128xf32> -> vector<8x128xf32>
    %15 = arith.addf %13, %14 : vector<8x128xf32>
    %16 = math.tanh %15 : vector<8x128xf32>
    %17 = arith.addi %9, %c0_i32_11 : i32
    %c8_i32_15 = arith.constant 8 : i32
    %18 = arith.cmpi slt, %17, %c8_i32_15 : i32
    %19 = arith.select %18, %16, %10 : vector<8x128xf32>
    %c1_i32 = arith.constant 1 : i32
    %20 = arith.index_cast %c1_i32 : i32 to index
    %c0_16 = arith.constant 0 : index
    %c0_17 = arith.constant 0 : index
    %21 = vector.load %arg6[%20, %c0_16, %c0_17] : memref<8x8x128xf32, #tpu.memory_space<vmem>>, vector<1x8x128xf32>
    %22 = vector.shape_cast %21 : vector<1x8x128xf32> to vector<8x128xf32>
    %cst_18 = arith.constant dense<0.000000e+00> : vector<8x128xf32>
    %23 = tpu.matmul %19, %8, %cst_18 {dimension_numbers = #tpu.dot_dimension_numbers<[1], [0], [0], [1], [0, 0, 1, 1], [], []>} : vector<8x128xf32>, vector<128x128xf32>, vector<8x128xf32> -> vector<8x128xf32>
    %24 = arith.addf %22, %23 : vector<8x128xf32>
    %25 = math.tanh %24 : vector<8x128xf32>
    %26 = arith.addi %9, %c1_i32 : i32
    %c8_i32_19 = arith.constant 8 : i32
    %27 = arith.cmpi slt, %26, %c8_i32_19 : i32
    %28 = arith.select %27, %25, %19 : vector<8x128xf32>
    %c2_i32 = arith.constant 2 : i32
    %29 = arith.index_cast %c2_i32 : i32 to index
    %c0_20 = arith.constant 0 : index
    %c0_21 = arith.constant 0 : index
    %30 = vector.load %arg6[%29, %c0_20, %c0_21] : memref<8x8x128xf32, #tpu.memory_space<vmem>>, vector<1x8x128xf32>
    %31 = vector.shape_cast %30 : vector<1x8x128xf32> to vector<8x128xf32>
    %cst_22 = arith.constant dense<0.000000e+00> : vector<8x128xf32>
    %32 = tpu.matmul %28, %8, %cst_22 {dimension_numbers = #tpu.dot_dimension_numbers<[1], [0], [0], [1], [0, 0, 1, 1], [], []>} : vector<8x128xf32>, vector<128x128xf32>, vector<8x128xf32> -> vector<8x128xf32>
    %33 = arith.addf %31, %32 : vector<8x128xf32>
    %34 = math.tanh %33 : vector<8x128xf32>
    %35 = arith.addi %9, %c2_i32 : i32
    %c8_i32_23 = arith.constant 8 : i32
    %36 = arith.cmpi slt, %35, %c8_i32_23 : i32
    %37 = arith.select %36, %34, %28 : vector<8x128xf32>
    %c3_i32 = arith.constant 3 : i32
    %38 = arith.index_cast %c3_i32 : i32 to index
    %c0_24 = arith.constant 0 : index
    %c0_25 = arith.constant 0 : index
    %39 = vector.load %arg6[%38, %c0_24, %c0_25] : memref<8x8x128xf32, #tpu.memory_space<vmem>>, vector<1x8x128xf32>
    %40 = vector.shape_cast %39 : vector<1x8x128xf32> to vector<8x128xf32>
    %cst_26 = arith.constant dense<0.000000e+00> : vector<8x128xf32>
    %41 = tpu.matmul %37, %8, %cst_26 {dimension_numbers = #tpu.dot_dimension_numbers<[1], [0], [0], [1], [0, 0, 1, 1], [], []>} : vector<8x128xf32>, vector<128x128xf32>, vector<8x128xf32> -> vector<8x128xf32>
    %42 = arith.addf %40, %41 : vector<8x128xf32>
    %43 = math.tanh %42 : vector<8x128xf32>
    %44 = arith.addi %9, %c3_i32 : i32
    %c8_i32_27 = arith.constant 8 : i32
    %45 = arith.cmpi slt, %44, %c8_i32_27 : i32
    %46 = arith.select %45, %43, %37 : vector<8x128xf32>
    %c4_i32 = arith.constant 4 : i32
    %47 = arith.index_cast %c4_i32 : i32 to index
    %c0_28 = arith.constant 0 : index
    %c0_29 = arith.constant 0 : index
    %48 = vector.load %arg6[%47, %c0_28, %c0_29] : memref<8x8x128xf32, #tpu.memory_space<vmem>>, vector<1x8x128xf32>
    %49 = vector.shape_cast %48 : vector<1x8x128xf32> to vector<8x128xf32>
    %cst_30 = arith.constant dense<0.000000e+00> : vector<8x128xf32>
    %50 = tpu.matmul %46, %8, %cst_30 {dimension_numbers = #tpu.dot_dimension_numbers<[1], [0], [0], [1], [0, 0, 1, 1], [], []>} : vector<8x128xf32>, vector<128x128xf32>, vector<8x128xf32> -> vector<8x128xf32>
    %51 = arith.addf %49, %50 : vector<8x128xf32>
    %52 = math.tanh %51 : vector<8x128xf32>
    %53 = arith.addi %9, %c4_i32 : i32
    %c8_i32_31 = arith.constant 8 : i32
    %54 = arith.cmpi slt, %53, %c8_i32_31 : i32
    %55 = arith.select %54, %52, %46 : vector<8x128xf32>
    %c5_i32 = arith.constant 5 : i32
    %56 = arith.index_cast %c5_i32 : i32 to index
    %c0_32 = arith.constant 0 : index
    %c0_33 = arith.constant 0 : index
    %57 = vector.load %arg6[%56, %c0_32, %c0_33] : memref<8x8x128xf32, #tpu.memory_space<vmem>>, vector<1x8x128xf32>
    %58 = vector.shape_cast %57 : vector<1x8x128xf32> to vector<8x128xf32>
    %cst_34 = arith.constant dense<0.000000e+00> : vector<8x128xf32>
    %59 = tpu.matmul %55, %8, %cst_34 {dimension_numbers = #tpu.dot_dimension_numbers<[1], [0], [0], [1], [0, 0, 1, 1], [], []>} : vector<8x128xf32>, vector<128x128xf32>, vector<8x128xf32> -> vector<8x128xf32>
    %60 = arith.addf %58, %59 : vector<8x128xf32>
    %61 = math.tanh %60 : vector<8x128xf32>
    %62 = arith.addi %9, %c5_i32 : i32
    %c8_i32_35 = arith.constant 8 : i32
    %63 = arith.cmpi slt, %62, %c8_i32_35 : i32
    %64 = arith.select %63, %61, %55 : vector<8x128xf32>
    %c6_i32 = arith.constant 6 : i32
    %65 = arith.index_cast %c6_i32 : i32 to index
    %c0_36 = arith.constant 0 : index
    %c0_37 = arith.constant 0 : index
    %66 = vector.load %arg6[%65, %c0_36, %c0_37] : memref<8x8x128xf32, #tpu.memory_space<vmem>>, vector<1x8x128xf32>
    %67 = vector.shape_cast %66 : vector<1x8x128xf32> to vector<8x128xf32>
    %cst_38 = arith.constant dense<0.000000e+00> : vector<8x128xf32>
    %68 = tpu.matmul %64, %8, %cst_38 {dimension_numbers = #tpu.dot_dimension_numbers<[1], [0], [0], [1], [0, 0, 1, 1], [], []>} : vector<8x128xf32>, vector<128x128xf32>, vector<8x128xf32> -> vector<8x128xf32>
    %69 = arith.addf %67, %68 : vector<8x128xf32>
    %70 = math.tanh %69 : vector<8x128xf32>
    %71 = arith.addi %9, %c6_i32 : i32
    %c8_i32_39 = arith.constant 8 : i32
    %72 = arith.cmpi slt, %71, %c8_i32_39 : i32
    %73 = arith.select %72, %70, %64 : vector<8x128xf32>
    %c7_i32 = arith.constant 7 : i32
    %74 = arith.index_cast %c7_i32 : i32 to index
    %c0_40 = arith.constant 0 : index
    %c0_41 = arith.constant 0 : index
    %75 = vector.load %arg6[%74, %c0_40, %c0_41] : memref<8x8x128xf32, #tpu.memory_space<vmem>>, vector<1x8x128xf32>
    %76 = vector.shape_cast %75 : vector<1x8x128xf32> to vector<8x128xf32>
    %cst_42 = arith.constant dense<0.000000e+00> : vector<8x128xf32>
    %77 = tpu.matmul %73, %8, %cst_42 {dimension_numbers = #tpu.dot_dimension_numbers<[1], [0], [0], [1], [0, 0, 1, 1], [], []>} : vector<8x128xf32>, vector<128x128xf32>, vector<8x128xf32> -> vector<8x128xf32>
    %78 = arith.addf %76, %77 : vector<8x128xf32>
    %79 = math.tanh %78 : vector<8x128xf32>
    %80 = arith.addi %9, %c7_i32 : i32
    %c8_i32_43 = arith.constant 8 : i32
    %81 = arith.cmpi slt, %80, %c8_i32_43 : i32
    %82 = arith.select %81, %79, %73 : vector<8x128xf32>
    %c8_i32_44 = arith.constant 8 : i32
    %c0_45 = arith.constant 0 : index
    %c0_46 = arith.constant 0 : index
    %83 = vector.load %arg5[%c0_45, %c0_46] : memref<8x128xf32, #tpu.memory_space<vmem>>, vector<8x128xf32>
    tpu.vector_store %arg5[%c0_45, %c0_46], %82 {strides = array<i32>} : memref<8x128xf32, #tpu.memory_space<vmem>>, vector<8x128xf32>,
    %c0_i32_47 = arith.constant 0 : i32
    %84 = arith.cmpi eq, %arg0, %c0_i32_47 : i32
    %85 = arith.extui %84 : i1 to i32
    %c0_i32_48 = arith.constant 0 : i32
    %86 = arith.cmpi ne, %85, %c0_i32_48 : i32
    scf.if %86 {
      %c0_49 = arith.constant 0 : index
      %c0_50 = arith.constant 0 : index
      %87 = vector.load %arg4[%c0_49, %c0_50] : memref<8x128xf32, #tpu.memory_space<vmem>>, vector<8x128xf32>
      tpu.vector_store %arg4[%c0_49, %c0_50], %82 {strides = array<i32>} : memref<8x128xf32, #tpu.memory_space<vmem>>, vector<8x128xf32>,
    } else {
    }
    return
  }
  func.func @transform_0(%arg0: i32) -> (i32, i32) {
    %c0_i32 = arith.constant 0 : i32
    %c0_i32_0 = arith.constant 0 : i32
    return %arg0, %c0_i32 : i32, i32
  }
  func.func @transform_1(%arg0: i32) -> (i32, i32) {
    %c0_i32 = arith.constant 0 : i32
    %c0_i32_0 = arith.constant 0 : i32
    %c0_i32_1 = arith.constant 0 : i32
    return %c0_i32, %c0_i32_0 : i32, i32
  }
  func.func @transform_2(%arg0: i32) -> (i32, i32) {
    %c0_i32 = arith.constant 0 : i32
    %c0_i32_0 = arith.constant 0 : i32
    %c0_i32_1 = arith.constant 0 : i32
    return %c0_i32, %c0_i32_0 : i32, i32
  }
  func.func @transform_3(%arg0: i32) -> (i32, i32) {
    %c0_i32 = arith.constant 0 : i32
    %c0_i32_0 = arith.constant 0 : i32
    %c0_i32_1 = arith.constant 0 : i32
    return %c0_i32, %c0_i32_0 : i32, i32
  }
}

module attributes {stable_mosaic.version = 11 : i64} {
  func.func @_rnn_kernel(%arg0: i32, %arg1: memref<64x16xf32, #tpu.memory_space<vmem>>, %arg2: memref<16x128xf32, #tpu.memory_space<vmem>>, %arg3: memref<128x128xf32, #tpu.memory_space<vmem>>, %arg4: memref<8x128xf32, #tpu.memory_space<vmem>>, %arg5: memref<8x128xf32, #tpu.memory_space<vmem>>, %arg6: memref<8x8x128xf32, #tpu.memory_space<vmem>>) attributes {dimension_semantics = [#tpu.dimension_semantics<arbitrary>], iteration_bounds = array<i64: 1>, scalar_prefetch = 0 : i64, scratch_operands = 2 : i64, tpu.core_type = #tpu.core_type<tc>, window_params = [{transform_indices = @transform_0, window_bounds = array<i64: 64, 16>}, {pipeline_mode = #tpu.pipeline_mode<synchronous>, transform_indices = @transform_1, window_bounds = array<i64: 16, 128>}, {pipeline_mode = #tpu.pipeline_mode<synchronous>, transform_indices = @transform_2, window_bounds = array<i64: 128, 128>}, {pipeline_mode = #tpu.pipeline_mode<synchronous>, transform_indices = @transform_3, window_bounds = array<i64: 8, 128>}]} {
    %c0_i32 = arith.constant 0 : i32
    %0 = arith.cmpi eq, %arg0, %c0_i32 : i32
    %1 = arith.extui %0 : i1 to i32
    %c0_i32_0 = arith.constant 0 : i32
    %2 = arith.cmpi ne, %1, %c0_i32_0 : i32
    scf.if %2 {
      %cst_49 = arith.constant 0.000000e+00 : f32
      %87 = vector.broadcast %cst_49 : f32 to vector<8x128xf32>
      %c0_50 = arith.constant 0 : index
      %c0_51 = arith.constant 0 : index
      %88 = vector.load %arg5[%c0_50, %c0_51] : memref<8x128xf32, #tpu.memory_space<vmem>>, vector<8x128xf32>
      tpu.vector_store %arg5[%c0_50, %c0_51], %87 {strides = array<i32>} : memref<8x128xf32, #tpu.memory_space<vmem>>, vector<8x128xf32>,
    } else {
    }
    %c0 = arith.constant 0 : index
    %c0_1 = arith.constant 0 : index
    %3 = vector.load %arg1[%c0, %c0_1] : memref<64x16xf32, #tpu.memory_space<vmem>>, vector<64x16xf32>
    %c0_2 = arith.constant 0 : index
    %c0_3 = arith.constant 0 : index
    %4 = vector.load %arg2[%c0_2, %c0_3] : memref<16x128xf32, #tpu.memory_space<vmem>>, vector<16x128xf32>
    %cst = arith.constant dense<0.000000e+00> : vector<64x128xf32>
    %5 = tpu.matmul %3, %4, %cst {dimension_numbers = #tpu.dot_dimension_numbers<[1], [0], [0], [1], [0, 0, 1, 1], [], []>} : vector<64x16xf32>, vector<16x128xf32>, vector<64x128xf32> -> vector<64x128xf32>
    %6 = vector.shape_cast %5 : vector<64x128xf32> to vector<8x8x128xf32>
    %c0_4 = arith.constant 0 : index
    %c0_5 = arith.constant 0 : index
    %c0_6 = arith.constant 0 : index
    %7 = vector.load %arg6[%c0_4, %c0_5, %c0_6] : memref<8x8x128xf32, #tpu.memory_space<vmem>>, vector<8x8x128xf32>
    tpu.vector_store %arg6[%c0_4, %c0_5, %c0_6], %6 {strides = array<i32>} : memref<8x8x128xf32, #tpu.memory_space<vmem>>, vector<8x8x128xf32>,
    %c0_7 = arith.constant 0 : index
    %c0_8 = arith.constant 0 : index
    %8 = vector.load %arg3[%c0_7, %c0_8] : memref<128x128xf32, #tpu.memory_space<vmem>>, vector<128x128xf32>
    %c8_i32 = arith.constant 8 : i32
    %9 = arith.muli %arg0, %c8_i32 : i32
    %c0_9 = arith.constant 0 : index
    %c0_10 = arith.constant 0 : index
    %10 = vector.load %arg5[%c0_9, %c0_10] : memref<8x128xf32, #tpu.memory_space<vmem>>, vector<8x128xf32>
    %c0_i32_11 = arith.constant 0 : i32
    %11 = arith.index_cast %c0_i32_11 : i32 to index
    %c0_12 = arith.constant 0 : index
    %c0_13 = arith.constant 0 : index
    %12 = vector.load %arg6[%11, %c0_12, %c0_13] : memref<8x8x128xf32, #tpu.memory_space<vmem>>, vector<1x8x128xf32>
    %13 = vector.shape_cast %12 : vector<1x8x128xf32> to vector<8x128xf32>
    %cst_14 = arith.constant dense<0.000000e+00> : vector<8x128xf32>
    %14 = tpu.matmul %10, %8, %cst_14 {dimension_numbers = #tpu.dot_dimension_numbers<[1], [0], [0], [1], [0, 0, 1, 1], [], []>} : vector<8x128xf32>, vector<128x128xf32>, vector<8x128xf32> -> vector<8x128xf32>
    %15 = arith.addf %13, %14 : vector<8x128xf32>
    %16 = math.tanh %15 : vector<8x128xf32>
    %17 = arith.addi %9, %c0_i32_11 : i32
    %c8_i32_15 = arith.constant 8 : i32
    %18 = arith.cmpi slt, %17, %c8_i32_15 : i32
    %19 = arith.select %18, %16, %10 : vector<8x128xf32>
    %c1_i32 = arith.constant 1 : i32
    %20 = arith.index_cast %c1_i32 : i32 to index
    %c0_16 = arith.constant 0 : index
    %c0_17 = arith.constant 0 : index
    %21 = vector.load %arg6[%20, %c0_16, %c0_17] : memref<8x8x128xf32, #tpu.memory_space<vmem>>, vector<1x8x128xf32>
    %22 = vector.shape_cast %21 : vector<1x8x128xf32> to vector<8x128xf32>
    %cst_18 = arith.constant dense<0.000000e+00> : vector<8x128xf32>
    %23 = tpu.matmul %19, %8, %cst_18 {dimension_numbers = #tpu.dot_dimension_numbers<[1], [0], [0], [1], [0, 0, 1, 1], [], []>} : vector<8x128xf32>, vector<128x128xf32>, vector<8x128xf32> -> vector<8x128xf32>
    %24 = arith.addf %22, %23 : vector<8x128xf32>
    %25 = math.tanh %24 : vector<8x128xf32>
    %26 = arith.addi %9, %c1_i32 : i32
    %c8_i32_19 = arith.constant 8 : i32
    %27 = arith.cmpi slt, %26, %c8_i32_19 : i32
    %28 = arith.select %27, %25, %19 : vector<8x128xf32>
    %c2_i32 = arith.constant 2 : i32
    %29 = arith.index_cast %c2_i32 : i32 to index
    %c0_20 = arith.constant 0 : index
    %c0_21 = arith.constant 0 : index
    %30 = vector.load %arg6[%29, %c0_20, %c0_21] : memref<8x8x128xf32, #tpu.memory_space<vmem>>, vector<1x8x128xf32>
    %31 = vector.shape_cast %30 : vector<1x8x128xf32> to vector<8x128xf32>
    %cst_22 = arith.constant dense<0.000000e+00> : vector<8x128xf32>
    %32 = tpu.matmul %28, %8, %cst_22 {dimension_numbers = #tpu.dot_dimension_numbers<[1], [0], [0], [1], [0, 0, 1, 1], [], []>} : vector<8x128xf32>, vector<128x128xf32>, vector<8x128xf32> -> vector<8x128xf32>
    %33 = arith.addf %31, %32 : vector<8x128xf32>
    %34 = math.tanh %33 : vector<8x128xf32>
    %35 = arith.addi %9, %c2_i32 : i32
    %c8_i32_23 = arith.constant 8 : i32
    %36 = arith.cmpi slt, %35, %c8_i32_23 : i32
    %37 = arith.select %36, %34, %28 : vector<8x128xf32>
    %c3_i32 = arith.constant 3 : i32
    %38 = arith.index_cast %c3_i32 : i32 to index
    %c0_24 = arith.constant 0 : index
    %c0_25 = arith.constant 0 : index
    %39 = vector.load %arg6[%38, %c0_24, %c0_25] : memref<8x8x128xf32, #tpu.memory_space<vmem>>, vector<1x8x128xf32>
    %40 = vector.shape_cast %39 : vector<1x8x128xf32> to vector<8x128xf32>
    %cst_26 = arith.constant dense<0.000000e+00> : vector<8x128xf32>
    %41 = tpu.matmul %37, %8, %cst_26 {dimension_numbers = #tpu.dot_dimension_numbers<[1], [0], [0], [1], [0, 0, 1, 1], [], []>} : vector<8x128xf32>, vector<128x128xf32>, vector<8x128xf32> -> vector<8x128xf32>
    %42 = arith.addf %40, %41 : vector<8x128xf32>
    %43 = math.tanh %42 : vector<8x128xf32>
    %44 = arith.addi %9, %c3_i32 : i32
    %c8_i32_27 = arith.constant 8 : i32
    %45 = arith.cmpi slt, %44, %c8_i32_27 : i32
    %46 = arith.select %45, %43, %37 : vector<8x128xf32>
    %c4_i32 = arith.constant 4 : i32
    %47 = arith.index_cast %c4_i32 : i32 to index
    %c0_28 = arith.constant 0 : index
    %c0_29 = arith.constant 0 : index
    %48 = vector.load %arg6[%47, %c0_28, %c0_29] : memref<8x8x128xf32, #tpu.memory_space<vmem>>, vector<1x8x128xf32>
    %49 = vector.shape_cast %48 : vector<1x8x128xf32> to vector<8x128xf32>
    %cst_30 = arith.constant dense<0.000000e+00> : vector<8x128xf32>
    %50 = tpu.matmul %46, %8, %cst_30 {dimension_numbers = #tpu.dot_dimension_numbers<[1], [0], [0], [1], [0, 0, 1, 1], [], []>} : vector<8x128xf32>, vector<128x128xf32>, vector<8x128xf32> -> vector<8x128xf32>
    %51 = arith.addf %49, %50 : vector<8x128xf32>
    %52 = math.tanh %51 : vector<8x128xf32>
    %53 = arith.addi %9, %c4_i32 : i32
    %c8_i32_31 = arith.constant 8 : i32
    %54 = arith.cmpi slt, %53, %c8_i32_31 : i32
    %55 = arith.select %54, %52, %46 : vector<8x128xf32>
    %c5_i32 = arith.constant 5 : i32
    %56 = arith.index_cast %c5_i32 : i32 to index
    %c0_32 = arith.constant 0 : index
    %c0_33 = arith.constant 0 : index
    %57 = vector.load %arg6[%56, %c0_32, %c0_33] : memref<8x8x128xf32, #tpu.memory_space<vmem>>, vector<1x8x128xf32>
    %58 = vector.shape_cast %57 : vector<1x8x128xf32> to vector<8x128xf32>
    %cst_34 = arith.constant dense<0.000000e+00> : vector<8x128xf32>
    %59 = tpu.matmul %55, %8, %cst_34 {dimension_numbers = #tpu.dot_dimension_numbers<[1], [0], [0], [1], [0, 0, 1, 1], [], []>} : vector<8x128xf32>, vector<128x128xf32>, vector<8x128xf32> -> vector<8x128xf32>
    %60 = arith.addf %58, %59 : vector<8x128xf32>
    %61 = math.tanh %60 : vector<8x128xf32>
    %62 = arith.addi %9, %c5_i32 : i32
    %c8_i32_35 = arith.constant 8 : i32
    %63 = arith.cmpi slt, %62, %c8_i32_35 : i32
    %64 = arith.select %63, %61, %55 : vector<8x128xf32>
    %c6_i32 = arith.constant 6 : i32
    %65 = arith.index_cast %c6_i32 : i32 to index
    %c0_36 = arith.constant 0 : index
    %c0_37 = arith.constant 0 : index
    %66 = vector.load %arg6[%65, %c0_36, %c0_37] : memref<8x8x128xf32, #tpu.memory_space<vmem>>, vector<1x8x128xf32>
    %67 = vector.shape_cast %66 : vector<1x8x128xf32> to vector<8x128xf32>
    %cst_38 = arith.constant dense<0.000000e+00> : vector<8x128xf32>
    %68 = tpu.matmul %64, %8, %cst_38 {dimension_numbers = #tpu.dot_dimension_numbers<[1], [0], [0], [1], [0, 0, 1, 1], [], []>} : vector<8x128xf32>, vector<128x128xf32>, vector<8x128xf32> -> vector<8x128xf32>
    %69 = arith.addf %67, %68 : vector<8x128xf32>
    %70 = math.tanh %69 : vector<8x128xf32>
    %71 = arith.addi %9, %c6_i32 : i32
    %c8_i32_39 = arith.constant 8 : i32
    %72 = arith.cmpi slt, %71, %c8_i32_39 : i32
    %73 = arith.select %72, %70, %64 : vector<8x128xf32>
    %c7_i32 = arith.constant 7 : i32
    %74 = arith.index_cast %c7_i32 : i32 to index
    %c0_40 = arith.constant 0 : index
    %c0_41 = arith.constant 0 : index
    %75 = vector.load %arg6[%74, %c0_40, %c0_41] : memref<8x8x128xf32, #tpu.memory_space<vmem>>, vector<1x8x128xf32>
    %76 = vector.shape_cast %75 : vector<1x8x128xf32> to vector<8x128xf32>
    %cst_42 = arith.constant dense<0.000000e+00> : vector<8x128xf32>
    %77 = tpu.matmul %73, %8, %cst_42 {dimension_numbers = #tpu.dot_dimension_numbers<[1], [0], [0], [1], [0, 0, 1, 1], [], []>} : vector<8x128xf32>, vector<128x128xf32>, vector<8x128xf32> -> vector<8x128xf32>
    %78 = arith.addf %76, %77 : vector<8x128xf32>
    %79 = math.tanh %78 : vector<8x128xf32>
    %80 = arith.addi %9, %c7_i32 : i32
    %c8_i32_43 = arith.constant 8 : i32
    %81 = arith.cmpi slt, %80, %c8_i32_43 : i32
    %82 = arith.select %81, %79, %73 : vector<8x128xf32>
    %c8_i32_44 = arith.constant 8 : i32
    %c0_45 = arith.constant 0 : index
    %c0_46 = arith.constant 0 : index
    %83 = vector.load %arg5[%c0_45, %c0_46] : memref<8x128xf32, #tpu.memory_space<vmem>>, vector<8x128xf32>
    tpu.vector_store %arg5[%c0_45, %c0_46], %82 {strides = array<i32>} : memref<8x128xf32, #tpu.memory_space<vmem>>, vector<8x128xf32>,
    %c0_i32_47 = arith.constant 0 : i32
    %84 = arith.cmpi eq, %arg0, %c0_i32_47 : i32
    %85 = arith.extui %84 : i1 to i32
    %c0_i32_48 = arith.constant 0 : i32
    %86 = arith.cmpi ne, %85, %c0_i32_48 : i32
    scf.if %86 {
      %c0_49 = arith.constant 0 : index
      %c0_50 = arith.constant 0 : index
      %87 = vector.load %arg4[%c0_49, %c0_50] : memref<8x128xf32, #tpu.memory_space<vmem>>, vector<8x128xf32>
      tpu.vector_store %arg4[%c0_49, %c0_50], %82 {strides = array<i32>} : memref<8x128xf32, #tpu.memory_space<vmem>>, vector<8x128xf32>,
    } else {
    }
    return
  }
  func.func @transform_0(%arg0: i32) -> (i32, i32) {
    %c0_i32 = arith.constant 0 : i32
    %c0_i32_0 = arith.constant 0 : i32
    return %arg0, %c0_i32 : i32, i32
  }
  func.func @transform_1(%arg0: i32) -> (i32, i32) {
    %c0_i32 = arith.constant 0 : i32
    %c0_i32_0 = arith.constant 0 : i32
    %c0_i32_1 = arith.constant 0 : i32
    return %c0_i32, %c0_i32_0 : i32, i32
  }
  func.func @transform_2(%arg0: i32) -> (i32, i32) {
    %c0_i32 = arith.constant 0 : i32
    %c0_i32_0 = arith.constant 0 : i32
    %c0_i32_1 = arith.constant 0 : i32
    return %c0_i32, %c0_i32_0 : i32, i32
  }
  func.func @transform_3(%arg0: i32) -> (i32, i32) {
    %c0_i32 = arith.constant 0 : i32
    %c0_i32_0 = arith.constant 0 : i32
    %c0_i32_1 = arith.constant 0 : i32
    return %c0_i32, %c0_i32_0 : i32, i32
  }
}

</mosaic_0001>

<llo_original>
// kernel: tpu_custom_call.1
$region0: #{tpu_custom_call.1}
  #allocation0 [shape = 'u32[]', space=smem, size = 0x4, offset = 0x4, fixed_abs, tag = 'smem constant byte address 0x4 - core index']
  #allocation1 [shape = 'u32[144,128]{1,0:T(1,128)}', space=vmem, size = 0x12000, scoped, tag = 'internal scratch']
  #allocation2 [shape = 'f32[8,128]{1,0:T(8,128)}', space=vmem, size = 0x1000, scoped, tag = 'scratch operand']
  #allocation3 [shape = 'f32[8,8,128]{2,1,0:T(8,128)}', space=vmem, size = 0x8000, scoped, tag = 'scratch operand']
  %s0 = inlined_call_operand.vmem [shape: f32[64,16], index: 0, kind: input, shape index: {}]
  %s1 = inlined_call_operand.vmem [shape: f32[16,128], index: 1, kind: input, shape index: {}]
  %s2 = inlined_call_operand.hbm [shape: f32[128,128], index: 2, kind: input, shape index: {}]
  %s3 = inlined_call_operand.hbm [shape: f32[8,128], index: 3, kind: output, shape index: {}]
  %s4 = sld [smem:[#allocation0]]
  $region34: #{tpu_custom_call.1} parent=0
    _
  %s6 = ssub.s32 1, %s4
  %s7 = scalar_select 0, %s6, %s4
  $region1: #{tpu_custom_call.1} parent=0
    #allocation4 [shape = 'u8[65536]{0}', space=vmem, size = 0x10000, scoped, tag = 'input window, operand 2, single buffered']
    #allocation5 [shape = 's32[1]{0}', space=sflag, size = 0x4, scoped, tag = 'scoped memory for tpu_custom_call.1']
    #allocation6 [shape = 's32[1]{0}', space=sflag, size = 0x4, scoped, tag = 'scoped memory for tpu_custom_call.1']
    #allocation7 [shape = 'u8[4096]{0}', space=vmem, size = 0x1000, scoped, tag = 'output window, operand 0, single buffered']
    %8 = vsyncpa [#allocation5], 0
    %9 = vsyncpa [#allocation6], 0
    // Predicated region
    $region2: #{tpu_custom_call.1} parent=1 // pred_check
      _
    $region3: #{tpu_custom_call.1} parent=1 // pred_check_branch
      %11 = sbr.rel (0) target = $region5
    $region4: #{tpu_custom_call.1} parent=1 // pred_region
      _
    $region5: #{tpu_custom_call.1} parent=1 // pred_fallthru
      _
    // Predicated region
    $region6: #{tpu_custom_call.1} parent=1 // pred_check
      _
    $region7: #{tpu_custom_call.1} parent=1 // pred_check_branch
      %13 = sbr.rel (0) target = $region9
    $region8: #{tpu_custom_call.1} parent=1 // pred_region
      _
    $region9: #{tpu_custom_call.1} parent=1 // pred_fallthru
      _
    // Predicated region
    $region10: #{tpu_custom_call.1} parent=1 // pred_check
      _
    $region11: #{tpu_custom_call.1} parent=1 // pred_check_branch
      %15 = sbr.rel (0) target = $region13
    $region12: #{tpu_custom_call.1} parent=1 // pred_region
      %s17 = ssub.s32 2048, 2048
      %18 = vsyncadd [#allocation5], %s17
      %s19 = sshll.u32 [#allocation4], 4
      %s20 = int_to_ptr.vmem [resolvable:$true] %s19
      %25 = dma.hbm_to_vmem [thread:$0]  %s2, 2048, %s20, [#allocation5], 128, 128, 8
    $region13: #{tpu_custom_call.1} parent=1 // pred_fallthru
      _
    // Predicated region
    $region14: #{tpu_custom_call.1} parent=1 // pred_check
      _
    $region15: #{tpu_custom_call.1} parent=1 // pred_check_branch
      %27 = sbr.rel (0) target = $region17
    $region16: #{tpu_custom_call.1} parent=1 // pred_region
      %28 = dma.done [#allocation5], 2048
    $region17: #{tpu_custom_call.1} parent=1 // pred_fallthru
      _
    %p29 = scmp.eq.s32.totalorder 0, 0
    // Predicated region
    $region18: #{tpu_custom_call.1} parent=1 // pred_check
      %p30 = pneg %p29
    $region19: #{tpu_custom_call.1} parent=1 // pred_check_branch
      %32 = sbr.rel (%p30) target = $region21
    $region20: #{tpu_custom_call.1} parent=1 // pred_region
      %33 = vst [vmem:[#allocation2] sm:$0xff] 0.0
    $region21: #{tpu_custom_call.1} parent=1 // pred_fallthru
      _
    %v34 = vld [vmem:[%s0] sm:$0xff]
    %v35 = vld [vmem:[%s0 + $0x8] sm:$0xff]
    %v36 = vld [vmem:[%s0 + $0x10] sm:$0xff]
    %v37 = vld [vmem:[%s0 + $0x18] sm:$0xff]
    %v38 = vld [vmem:[%s0 + $0x20] sm:$0xff]
    %v39 = vld [vmem:[%s0 + $0x28] sm:$0xff]
    %v40 = vld [vmem:[%s0 + $0x30] sm:$0xff]
    %v41 = vld [vmem:[%s0 + $0x38] sm:$0xff]
    %v42 = vld [vmem:[%s1] sm:$0xff]
    %v43 = vld [vmem:[%s1 + $0x8] sm:$0xff]
    %vm44 = vcmask 130048
    %v46 = vsel %vm44, %v34, 0
    %v49 = vsel %vm44, %v35, 0
    %v52 = vsel %vm44, %v36, 0
    %v55 = vsel %vm44, %v37, 0
    %v58 = vsel %vm44, %v38, 0
    %v61 = vsel %vm44, %v39, 0
    %v64 = vsel %vm44, %v40, 0
    %v67 = vsel %vm44, %v41, 0
    %69 = vmatprep.subr.mxu0 0.0
    %70 = vmatpush1.msra.mxu0 %v42
    %71 = vmatprep.subr.mxu0 0.0
    %72 = vmatpush1.msra.mxu0 %v43
    %73 = vmatprep.subr.mxu0 0.0
    %74 = vmatpush1.msra.mxu0 0.0
    %75 = vmatprep.subr.mxu0 0.0
    %76 = vmatpush1.msra.mxu0 0.0
    %77 = vmatprep.subr.mxu0 0.0
    %78 = vmatpush1.msra.mxu0 0.0
    %79 = vmatprep.subr.mxu0 0.0
    %80 = vmatpush1.msra.mxu0 0.0
    %81 = vmatprep.subr.mxu0 0.0
    %82 = vmatpush1.msra.mxu0 0.0
    %83 = vmatprep.subr.mxu0 0.0
    %84 = vmatpush1.msra.mxu0 0.0
    %85 = vmatprep.subr.mxu0 0.0
    %86 = vmatpush1.msra.mxu0 0.0
    %87 = vmatprep.subr.mxu0 0.0
    %88 = vmatpush1.msra.mxu0 0.0
    %89 = vmatprep.subr.mxu0 0.0
    %90 = vmatpush1.msra.mxu0 0.0
    %91 = vmatprep.subr.mxu0 0.0
    %92 = vmatpush1.msra.mxu0 0.0
    %93 = vmatprep.subr.mxu0 0.0
    %94 = vmatpush1.msra.mxu0 0.0
    %95 = vmatprep.subr.mxu0 0.0
    %96 = vmatpush1.msra.mxu0 0.0
    %97 = vmatprep.subr.mxu0 0.0
    %98 = vmatpush1.msra.mxu0 0.0
    %99 = vmatprep.subr.mxu0 0.0
    %100 = vmatpush1.msra.mxu0 0.0
    %101 = vmatprep.subr.mxu0 0.0
    %102 = vmatpush1.msra.mxu0 0.0
    %103 = vmatprep.subr.mxu0 0.0
    %104 = vmatpush1.msra.mxu0 0.0
    %105 = vmatprep.subr.mxu0 0.0
    %106 = vmatpush1.msra.mxu0 0.0
    %107 = vmatprep.subr.mxu0 0.0
    %108 = vmatpush1.msra.mxu0 0.0
    %109 = vmatprep.subr.mxu0 0.0
    %110 = vmatpush1.msra.mxu0 0.0
    %111 = vmatprep.subr.mxu0 0.0
    %112 = vmatpush1.msra.mxu0 0.0
    %113 = vmatprep.subr.mxu0 0.0
    %114 = vmatpush1.msra.mxu0 0.0
    %115 = vmatprep.subr.mxu0 0.0
    %116 = vmatpush1.msra.mxu0 0.0
    %117 = vmatprep.subr.mxu0 0.0
    %118 = vmatpush1.msra.mxu0 0.0
    %119 = vmatprep.subr.mxu0 0.0
    %120 = vmatpush1.msra.mxu0 0.0
    %121 = vmatprep.subr.mxu0 0.0
    %122 = vmatpush1.msra.mxu0 0.0
    %123 = vmatprep.subr.mxu0 0.0
    %124 = vmatpush1.msra.mxu0 0.0
    %125 = vmatprep.subr.mxu0 0.0
    %126 = vmatpush1.msra.mxu0 0.0
    %127 = vmatprep.subr.mxu0 0.0
    %128 = vmatpush1.msra.mxu0 0.0
    %129 = vmatprep.subr.mxu0 0.0
    %130 = vmatpush1.msra.mxu0 0.0
    %131 = vmatprep.subr.mxu0 0.0
    %132 = vmatpush1.msra.mxu0 0.0
    %133 = vmatprep.mubr.f32.mxu0 0.0
    %134 = vmatmul.mubr.f32.gmra.mrb[0].mxu0 %v46
    %v135 = vpop.f32.mrb[0].mxu0
    %v136 = vadd.f32 0.0, %v135
    %v137 = vpop.f32.mrb[0].mxu0
    %138 = vmatprep.mubr.f32.mxu0 0.0
    %139 = vmatmul.mubr.f32.gmra.mrb[0].mxu0 %v49
    %v140 = vpop.f32.mrb[0].mxu0
    %v141 = vadd.f32 0.0, %v140
    %v142 = vpop.f32.mrb[0].mxu0
    %143 = vmatprep.mubr.f32.mxu0 0.0
    %144 = vmatmul.mubr.f32.gmra.mrb[0].mxu0 %v52
    %v145 = vpop.f32.mrb[0].mxu0
    %v146 = vadd.f32 0.0, %v145
    %v147 = vpop.f32.mrb[0].mxu0
    %148 = vmatprep.mubr.f32.mxu0 0.0
    %149 = vmatmul.mubr.f32.gmra.mrb[0].mxu0 %v55
    %v150 = vpop.f32.mrb[0].mxu0
    %v151 = vadd.f32 0.0, %v150
    %v152 = vpop.f32.mrb[0].mxu0
    %153 = vmatprep.mubr.f32.mxu0 0.0
    %154 = vmatmul.mubr.f32.gmra.mrb[0].mxu0 %v58
    %v155 = vpop.f32.mrb[0].mxu0
    %v156 = vadd.f32 0.0, %v155
    %v157 = vpop.f32.mrb[0].mxu0
    %158 = vmatprep.mubr.f32.mxu0 0.0
    %159 = vmatmul.mubr.f32.gmra.mrb[0].mxu0 %v61
    %v160 = vpop.f32.mrb[0].mxu0
    %v161 = vadd.f32 0.0, %v160
    %v162 = vpop.f32.mrb[0].mxu0
    %163 = vmatprep.mubr.f32.mxu0 0.0
    %164 = vmatmul.mubr.f32.gmra.mrb[0].mxu0 %v64
    %v165 = vpop.f32.mrb[0].mxu0
    %v166 = vadd.f32 0.0, %v165
    %v167 = vpop.f32.mrb[0].mxu0
    %168 = vmatprep.mubr.f32.mxu0 0.0
    %169 = vmatmul.mubr.f32.gmra.mrb[0].mxu0 %v67
    %v170 = vpop.f32.mrb[0].mxu0
    %v171 = vadd.f32 0.0, %v170
    %v172 = vpop.f32.mrb[0].mxu0
    %173 = vdwg.mxu0
    %174 = vst [vmem:[#allocation3] sm:$0xff] %v136
    %175 = vst [vmem:[#allocation3 + $0x8] sm:$0xff] %v141
    %176 = vst [vmem:[#allocation3 + $0x10] sm:$0xff] %v146
    %177 = vst [vmem:[#allocation3 + $0x18] sm:$0xff] %v151
    %178 = vst [vmem:[#allocation3 + $0x20] sm:$0xff] %v156
    %179 = vst [vmem:[#allocation3 + $0x28] sm:$0xff] %v161
    %180 = vst [vmem:[#allocation3 + $0x30] sm:$0xff] %v166
    %181 = vst [vmem:[#allocation3 + $0x38] sm:$0xff] %v171
    %v182 = vld [vmem:[#allocation4] sm:$0xff]
    %v183 = vld [vmem:[#allocation4 + $0x8] sm:$0xff]
    %v184 = vld [vmem:[#allocation4 + $0x10] sm:$0xff]
    %v185 = vld [vmem:[#allocation4 + $0x18] sm:$0xff]
    %v186 = vld [vmem:[#allocation4 + $0x20] sm:$0xff]
    %v187 = vld [vmem:[#allocation4 + $0x28] sm:$0xff]
    %v188 = vld [vmem:[#allocation4 + $0x30] sm:$0xff]
    %v189 = vld [vmem:[#allocation4 + $0x38] sm:$0xff]
    %v190 = vld [vmem:[#allocation4 + $0x40] sm:$0xff]
    %v191 = vld [vmem:[#allocation4 + $0x48] sm:$0xff]
    %v192 = vld [vmem:[#allocation4 + $0x50] sm:$0xff]
    %v193 = vld [vmem:[#allocation4 + $0x58] sm:$0xff]
    %v194 = vld [vmem:[#allocation4 + $0x60] sm:$0xff]
    %v195 = vld [vmem:[#allocation4 + $0x68] sm:$0xff]
    %v196 = vld [vmem:[#allocation4 + $0x70] sm:$0xff]
    %v197 = vld [vmem:[#allocation4 + $0x78] sm:$0xff]
    %s198 = smul.u32 0, 8
    %v199 = vld [vmem:[#allocation2] sm:$0xff]
    %v200 = vld [vmem:[#allocation3] sm:$0xff]
    %201 = vmatprep.subr.mxu0 0.0
    %202 = vmatpush1.msra.mxu0 %v182
    %203 = vmatprep.subr.mxu0 0.0
    %204 = vmatpush1.msra.mxu0 %v183
    %205 = vmatprep.subr.mxu0 0.0
    %206 = vmatpush1.msra.mxu0 %v184
    %207 = vmatprep.subr.mxu0 0.0
    %208 = vmatpush1.msra.mxu0 %v185
    %209 = vmatprep.subr.mxu0 0.0
    %210 = vmatpush1.msra.mxu0 %v186
    %211 = vmatprep.subr.mxu0 0.0
    %212 = vmatpush1.msra.mxu0 %v187
    %213 = vmatprep.subr.mxu0 0.0
    %214 = vmatpush1.msra.mxu0 %v188
    %215 = vmatprep.subr.mxu0 0.0
    %216 = vmatpush1.msra.mxu0 %v189
    %217 = vmatprep.subr.mxu0 0.0
    %218 = vmatpush1.msra.mxu0 %v190
    %219 = vmatprep.subr.mxu0 0.0
    %220 = vmatpush1.msra.mxu0 %v191
    %221 = vmatprep.subr.mxu0 0.0
    %222 = vmatpush1.msra.mxu0 %v192
    %223 = vmatprep.subr.mxu0 0.0
    %224 = vmatpush1.msra.mxu0 %v193
    %225 = vmatprep.subr.mxu0 0.0
    %226 = vmatpush1.msra.mxu0 %v194
    %227 = vmatprep.subr.mxu0 0.0
    %228 = vmatpush1.msra.mxu0 %v195
    %229 = vmatprep.subr.mxu0 0.0
    %230 = vmatpush1.msra.mxu0 %v196
    %231 = vmatprep.subr.mxu0 0.0
    %232 = vmatpush1.msra.mxu0 %v197
    %233 = vmatprep.subr.mxu0 0.0
    %234 = vmatpush1.msra.mxu0 0.0
    %235 = vmatprep.subr.mxu0 0.0
    %236 = vmatpush1.msra.mxu0 0.0
    %237 = vmatprep.subr.mxu0 0.0
    %238 = vmatpush1.msra.mxu0 0.0
    %239 = vmatprep.subr.mxu0 0.0
    %240 = vmatpush1.msra.mxu0 0.0
    %241 = vmatprep.subr.mxu0 0.0
    %242 = vmatpush1.msra.mxu0 0.0
    %243 = vmatprep.subr.mxu0 0.0
    %244 = vmatpush1.msra.mxu0 0.0
    %245 = vmatprep.subr.mxu0 0.0
    %246 = vmatpush1.msra.mxu0 0.0
    %247 = vmatprep.subr.mxu0 0.0
    %248 = vmatpush1.msra.mxu0 0.0
    %249 = vmatprep.subr.mxu0 0.0
    %250 = vmatpush1.msra.mxu0 0.0
    %251 = vmatprep.subr.mxu0 0.0
    %252 = vmatpush1.msra.mxu0 0.0
    %253 = vmatprep.subr.mxu0 0.0
    %254 = vmatpush1.msra.mxu0 0.0
    %255 = vmatprep.subr.mxu0 0.0
    %256 = vmatpush1.msra.mxu0 0.0
    %257 = vmatprep.subr.mxu0 0.0
    %258 = vmatpush1.msra.mxu0 0.0
    %259 = vmatprep.subr.mxu0 0.0
    %260 = vmatpush1.msra.mxu0 0.0
    %261 = vmatprep.subr.mxu0 0.0
    %262 = vmatpush1.msra.mxu0 0.0
    %263 = vmatprep.subr.mxu0 0.0
    %264 = vmatpush1.msra.mxu0 0.0
    %265 = vmatprep.mubr.f32.mxu0 0.0
    %266 = vmatmul.mubr.f32.gmra.mrb[0].mxu0 %v199
    %v267 = vpop.f32.mrb[0].mxu0
    %v268 = vadd.f32 0.0, %v267
    %v269 = vpop.f32.mrb[0].mxu0
    %270 = vdwg.mxu0
    %v271 = vadd.f32 %v200, %v268
    %v272 = vtanh.pop %v271
    %p273 = scmp.lt.s32.totalorder %s198, 8
    %s274 = scalar_select %p273, 1, 0
    %v275 = vstv %s274
    %vm276 = vcmp.eq.s32.totalorder %v275, 1
    %v277 = vsel %vm276, %v272, %v199
    %s278 = scalar_lea.vmem [#allocation3], 8
    %v279 = vld [vmem:[%s278] sm:$0xff]
    %280 = vmatprep.subr.mxu0 0.0
    %281 = vmatpush1.msra.mxu0 %v182
    %282 = vmatprep.subr.mxu0 0.0
    %283 = vmatpush1.msra.mxu0 %v183
    %284 = vmatprep.subr.mxu0 0.0
    %285 = vmatpush1.msra.mxu0 %v184
    %286 = vmatprep.subr.mxu0 0.0
    %287 = vmatpush1.msra.mxu0 %v185
    %288 = vmatprep.subr.mxu0 0.0
    %289 = vmatpush1.msra.mxu0 %v186
    %290 = vmatprep.subr.mxu0 0.0
    %291 = vmatpush1.msra.mxu0 %v187
    %292 = vmatprep.subr.mxu0 0.0
    %293 = vmatpush1.msra.mxu0 %v188
    %294 = vmatprep.subr.mxu0 0.0
    %295 = vmatpush1.msra.mxu0 %v189
    %296 = vmatprep.subr.mxu0 0.0
    %297 = vmatpush1.msra.mxu0 %v190
    %298 = vmatprep.subr.mxu0 0.0
    %299 = vmatpush1.msra.mxu0 %v191
    %300 = vmatprep.subr.mxu0 0.0
    %301 = vmatpush1.msra.mxu0 %v192
    %302 = vmatprep.subr.mxu0 0.0
    %303 = vmatpush1.msra.mxu0 %v193
    %304 = vmatprep.subr.mxu0 0.0
    %305 = vmatpush1.msra.mxu0 %v194
    %306 = vmatprep.subr.mxu0 0.0
    %307 = vmatpush1.msra.mxu0 %v195
    %308 = vmatprep.subr.mxu0 0.0
    %309 = vmatpush1.msra.mxu0 %v196
    %310 = vmatprep.subr.mxu0 0.0
    %311 = vmatpush1.msra.mxu0 %v197
    %312 = vmatprep.subr.mxu0 0.0
    %313 = vmatpush1.msra.mxu0 0.0
    %314 = vmatprep.subr.mxu0 0.0
    %315 = vmatpush1.msra.mxu0 0.0
    %316 = vmatprep.subr.mxu0 0.0
    %317 = vmatpush1.msra.mxu0 0.0
    %318 = vmatprep.subr.mxu0 0.0
    %319 = vmatpush1.msra.mxu0 0.0
    %320 = vmatprep.subr.mxu0 0.0
    %321 = vmatpush1.msra.mxu0 0.0
    %322 = vmatprep.subr.mxu0 0.0
    %323 = vmatpush1.msra.mxu0 0.0
    %324 = vmatprep.subr.mxu0 0.0
    %325 = vmatpush1.msra.mxu0 0.0
    %326 = vmatprep.subr.mxu0 0.0
    %327 = vmatpush1.msra.mxu0 0.0
    %328 = vmatprep.subr.mxu0 0.0
    %329 = vmatpush1.msra.mxu0 0.0
    %330 = vmatprep.subr.mxu0 0.0
    %331 = vmatpush1.msra.mxu0 0.0
    %332 = vmatprep.subr.mxu0 0.0
    %333 = vmatpush1.msra.mxu0 0.0
    %334 = vmatprep.subr.mxu0 0.0
    %335 = vmatpush1.msra.mxu0 0.0
    %336 = vmatprep.subr.mxu0 0.0
    %337 = vmatpush1.msra.mxu0 0.0
    %338 = vmatprep.subr.mxu0 0.0
    %339 = vmatpush1.msra.mxu0 0.0
    %340 = vmatprep.subr.mxu0 0.0
    %341 = vmatpush1.msra.mxu0 0.0
    %342 = vmatprep.subr.mxu0 0.0
    %343 = vmatpush1.msra.mxu0 0.0
    %344 = vmatprep.mubr.f32.mxu0 0.0
    %345 = vmatmul.mubr.f32.gmra.mrb[0].mxu0 %v277
    %v346 = vpop.f32.mrb[0].mxu0
    %v347 = vadd.f32 0.0, %v346
    %v348 = vpop.f32.mrb[0].mxu0
    %349 = vdwg.mxu0
    %v350 = vadd.f32 %v279, %v347
    %v351 = vtanh.pop %v350
    %s352 = sadd.s32 %s198, 1
    %p353 = scmp.lt.s32.totalorder %s352, 8
    %s354 = scalar_select %p353, 1, 0
    %v355 = vstv %s354
    %vm356 = vcmp.eq.s32.totalorder %v355, 1
    %v357 = vsel %vm356, %v351, %v277
    %s358 = scalar_lea.vmem [#allocation3], 16
    %v359 = vld [vmem:[%s358] sm:$0xff]
    %360 = vmatprep.subr.mxu0 0.0
    %361 = vmatpush1.msra.mxu0 %v182
    %362 = vmatprep.subr.mxu0 0.0
    %363 = vmatpush1.msra.mxu0 %v183
    %364 = vmatprep.subr.mxu0 0.0
    %365 = vmatpush1.msra.mxu0 %v184
    %366 = vmatprep.subr.mxu0 0.0
    %367 = vmatpush1.msra.mxu0 %v185
    %368 = vmatprep.subr.mxu0 0.0
    %369 = vmatpush1.msra.mxu0 %v186
    %370 = vmatprep.subr.mxu0 0.0
    %371 = vmatpush1.msra.mxu0 %v187
    %372 = vmatprep.subr.mxu0 0.0
    %373 = vmatpush1.msra.mxu0 %v188
    %374 = vmatprep.subr.mxu0 0.0
    %375 = vmatpush1.msra.mxu0 %v189
    %376 = vmatprep.subr.mxu0 0.0
    %377 = vmatpush1.msra.mxu0 %v190
    %378 = vmatprep.subr.mxu0 0.0
    %379 = vmatpush1.msra.mxu0 %v191
    %380 = vmatprep.subr.mxu0 0.0
    %381 = vmatpush1.msra.mxu0 %v192
    %382 = vmatprep.subr.mxu0 0.0
    %383 = vmatpush1.msra.mxu0 %v193
    %384 = vmatprep.subr.mxu0 0.0
    %385 = vmatpush1.msra.mxu0 %v194
    %386 = vmatprep.subr.mxu0 0.0
    %387 = vmatpush1.msra.mxu0 %v195
    %388 = vmatprep.subr.mxu0 0.0
    %389 = vmatpush1.msra.mxu0 %v196
    %390 = vmatprep.subr.mxu0 0.0
    %391 = vmatpush1.msra.mxu0 %v197
    %392 = vmatprep.subr.mxu0 0.0
    %393 = vmatpush1.msra.mxu0 0.0
    %394 = vmatprep.subr.mxu0 0.0
    %395 = vmatpush1.msra.mxu0 0.0
    %396 = vmatprep.subr.mxu0 0.0
    %397 = vmatpush1.msra.mxu0 0.0
    %398 = vmatprep.subr.mxu0 0.0
    %399 = vmatpush1.msra.mxu0 0.0
    %400 = vmatprep.subr.mxu0 0.0
    %401 = vmatpush1.msra.mxu0 0.0
    %402 = vmatprep.subr.mxu0 0.0
    %403 = vmatpush1.msra.mxu0 0.0
    %404 = vmatprep.subr.mxu0 0.0
    %405 = vmatpush1.msra.mxu0 0.0
    %406 = vmatprep.subr.mxu0 0.0
    %407 = vmatpush1.msra.mxu0 0.0
    %408 = vmatprep.subr.mxu0 0.0
    %409 = vmatpush1.msra.mxu0 0.0
    %410 = vmatprep.subr.mxu0 0.0
    %411 = vmatpush1.msra.mxu0 0.0
    %412 = vmatprep.subr.mxu0 0.0
    %413 = vmatpush1.msra.mxu0 0.0
    %414 = vmatprep.subr.mxu0 0.0
    %415 = vmatpush1.msra.mxu0 0.0
    %416 = vmatprep.subr.mxu0 0.0
    %417 = vmatpush1.msra.mxu0 0.0
    %418 = vmatprep.subr.mxu0 0.0
    %419 = vmatpush1.msra.mxu0 0.0
    %420 = vmatprep.subr.mxu0 0.0
    %421 = vmatpush1.msra.mxu0 0.0
    %422 = vmatprep.subr.mxu0 0.0
    %423 = vmatpush1.msra.mxu0 0.0
    %424 = vmatprep.mubr.f32.mxu0 0.0
    %425 = vmatmul.mubr.f32.gmra.mrb[0].mxu0 %v357
    %v426 = vpop.f32.mrb[0].mxu0
    %v427 = vadd.f32 0.0, %v426
    %v428 = vpop.f32.mrb[0].mxu0
    %429 = vdwg.mxu0
    %v430 = vadd.f32 %v359, %v427
    %v431 = vtanh.pop %v430
    %s432 = sadd.s32 %s198, 2
    %p433 = scmp.lt.s32.totalorder %s432, 8
    %s434 = scalar_select %p433, 1, 0
    %v435 = vstv %s434
    %vm436 = vcmp.eq.s32.totalorder %v435, 1
    %v437 = vsel %vm436, %v431, %v357
    %s438 = scalar_lea.vmem [#allocation3], 24
    %v439 = vld [vmem:[%s438] sm:$0xff]
    %440 = vmatprep.subr.mxu0 0.0
    %441 = vmatpush1.msra.mxu0 %v182
    %442 = vmatprep.subr.mxu0 0.0
    %443 = vmatpush1.msra.mxu0 %v183
    %444 = vmatprep.subr.mxu0 0.0
    %445 = vmatpush1.msra.mxu0 %v184
    %446 = vmatprep.subr.mxu0 0.0
    %447 = vmatpush1.msra.mxu0 %v185
    %448 = vmatprep.subr.mxu0 0.0
    %449 = vmatpush1.msra.mxu0 %v186
    %450 = vmatprep.subr.mxu0 0.0
    %451 = vmatpush1.msra.mxu0 %v187
    %452 = vmatprep.subr.mxu0 0.0
    %453 = vmatpush1.msra.mxu0 %v188
    %454 = vmatprep.subr.mxu0 0.0
    %455 = vmatpush1.msra.mxu0 %v189
    %456 = vmatprep.subr.mxu0 0.0
    %457 = vmatpush1.msra.mxu0 %v190
    %458 = vmatprep.subr.mxu0 0.0
    %459 = vmatpush1.msra.mxu0 %v191
    %460 = vmatprep.subr.mxu0 0.0
    %461 = vmatpush1.msra.mxu0 %v192
    %462 = vmatprep.subr.mxu0 0.0
    %463 = vmatpush1.msra.mxu0 %v193
    %464 = vmatprep.subr.mxu0 0.0
    %465 = vmatpush1.msra.mxu0 %v194
    %466 = vmatprep.subr.mxu0 0.0
    %467 = vmatpush1.msra.mxu0 %v195
    %468 = vmatprep.subr.mxu0 0.0
    %469 = vmatpush1.msra.mxu0 %v196
    %470 = vmatprep.subr.mxu0 0.0
    %471 = vmatpush1.msra.mxu0 %v197
    %472 = vmatprep.subr.mxu0 0.0
    %473 = vmatpush1.msra.mxu0 0.0
    %474 = vmatprep.subr.mxu0 0.0
    %475 = vmatpush1.msra.mxu0 0.0
    %476 = vmatprep.subr.mxu0 0.0
    %477 = vmatpush1.msra.mxu0 0.0
    %478 = vmatprep.subr.mxu0 0.0
    %479 = vmatpush1.msra.mxu0 0.0
    %480 = vmatprep.subr.mxu0 0.0
    %481 = vmatpush1.msra.mxu0 0.0
    %482 = vmatprep.subr.mxu0 0.0
    %483 = vmatpush1.msra.mxu0 0.0
    %484 = vmatprep.subr.mxu0 0.0
    %485 = vmatpush1.msra.mxu0 0.0
    %486 = vmatprep.subr.mxu0 0.0
    %487 = vmatpush1.msra.mxu0 0.0
    %488 = vmatprep.subr.mxu0 0.0
    %489 = vmatpush1.msra.mxu0 0.0
    %490 = vmatprep.subr.mxu0 0.0
    %491 = vmatpush1.msra.mxu0 0.0
    %492 = vmatprep.subr.mxu0 0.0
    %493 = vmatpush1.msra.mxu0 0.0
    %494 = vmatprep.subr.mxu0 0.0
    %495 = vmatpush1.msra.mxu0 0.0
    %496 = vmatprep.subr.mxu0 0.0
    %497 = vmatpush1.msra.mxu0 0.0
    %498 = vmatprep.subr.mxu0 0.0
    %499 = vmatpush1.msra.mxu0 0.0
    %500 = vmatprep.subr.mxu0 0.0
    %501 = vmatpush1.msra.mxu0 0.0
    %502 = vmatprep.subr.mxu0 0.0
    %503 = vmatpush1.msra.mxu0 0.0
    %504 = vmatprep.mubr.f32.mxu0 0.0
    %505 = vmatmul.mubr.f32.gmra.mrb[0].mxu0 %v437
    %v506 = vpop.f32.mrb[0].mxu0
    %v507 = vadd.f32 0.0, %v506
    %v508 = vpop.f32.mrb[0].mxu0
    %509 = vdwg.mxu0
    %v510 = vadd.f32 %v439, %v507
    %v511 = vtanh.pop %v510
    %s512 = sadd.s32 %s198, 3
    %p513 = scmp.lt.s32.totalorder %s512, 8
    %s514 = scalar_select %p513, 1, 0
    %v515 = vstv %s514
    %vm516 = vcmp.eq.s32.totalorder %v515, 1
    %v517 = vsel %vm516, %v511, %v437
    %s518 = scalar_lea.vmem [#allocation3], 32
    %v519 = vld [vmem:[%s518] sm:$0xff]
    %520 = vmatprep.subr.mxu0 0.0
    %521 = vmatpush1.msra.mxu0 %v182
    %522 = vmatprep.subr.mxu0 0.0
    %523 = vmatpush1.msra.mxu0 %v183
    %524 = vmatprep.subr.mxu0 0.0
    %525 = vmatpush1.msra.mxu0 %v184
    %526 = vmatprep.subr.mxu0 0.0
    %527 = vmatpush1.msra.mxu0 %v185
    %528 = vmatprep.subr.mxu0 0.0
    %529 = vmatpush1.msra.mxu0 %v186
    %530 = vmatprep.subr.mxu0 0.0
    %531 = vmatpush1.msra.mxu0 %v187
    %532 = vmatprep.subr.mxu0 0.0
    %533 = vmatpush1.msra.mxu0 %v188
    %534 = vmatprep.subr.mxu0 0.0
    %535 = vmatpush1.msra.mxu0 %v189
    %536 = vmatprep.subr.mxu0 0.0
    %537 = vmatpush1.msra.mxu0 %v190
    %538 = vmatprep.subr.mxu0 0.0
    %539 = vmatpush1.msra.mxu0 %v191
    %540 = vmatprep.subr.mxu0 0.0
    %541 = vmatpush1.msra.mxu0 %v192
    %542 = vmatprep.subr.mxu0 0.0
    %543 = vmatpush1.msra.mxu0 %v193
    %544 = vmatprep.subr.mxu0 0.0
    %545 = vmatpush1.msra.mxu0 %v194
    %546 = vmatprep.subr.mxu0 0.0
    %547 = vmatpush1.msra.mxu0 %v195
    %548 = vmatprep.subr.mxu0 0.0
    %549 = vmatpush1.msra.mxu0 %v196
    %550 = vmatprep.subr.mxu0 0.0
    %551 = vmatpush1.msra.mxu0 %v197
    %552 = vmatprep.subr.mxu0 0.0
    %553 = vmatpush1.msra.mxu0 0.0
    %554 = vmatprep.subr.mxu0 0.0
    %555 = vmatpush1.msra.mxu0 0.0
    %556 = vmatprep.subr.mxu0 0.0
    %557 = vmatpush1.msra.mxu0 0.0
    %558 = vmatprep.subr.mxu0 0.0
    %559 = vmatpush1.msra.mxu0 0.0
    %560 = vmatprep.subr.mxu0 0.0
    %561 = vmatpush1.msra.mxu0 0.0
    %562 = vmatprep.subr.mxu0 0.0
    %563 = vmatpush1.msra.mxu0 0.0
    %564 = vmatprep.subr.mxu0 0.0
    %565 = vmatpush1.msra.mxu0 0.0
    %566 = vmatprep.subr.mxu0 0.0
    %567 = vmatpush1.msra.mxu0 0.0
    %568 = vmatprep.subr.mxu0 0.0
    %569 = vmatpush1.msra.mxu0 0.0
    %570 = vmatprep.subr.mxu0 0.0
    %571 = vmatpush1.msra.mxu0 0.0
    %572 = vmatprep.subr.mxu0 0.0
    %573 = vmatpush1.msra.mxu0 0.0
    %574 = vmatprep.subr.mxu0 0.0
    %575 = vmatpush1.msra.mxu0 0.0
    %576 = vmatprep.subr.mxu0 0.0
    %577 = vmatpush1.msra.mxu0 0.0
    %578 = vmatprep.subr.mxu0 0.0
    %579 = vmatpush1.msra.mxu0 0.0
    %580 = vmatprep.subr.mxu0 0.0
    %581 = vmatpush1.msra.mxu0 0.0
    %582 = vmatprep.subr.mxu0 0.0
    %583 = vmatpush1.msra.mxu0 0.0
    %584 = vmatprep.mubr.f32.mxu0 0.0
    %585 = vmatmul.mubr.f32.gmra.mrb[0].mxu0 %v517
    %v586 = vpop.f32.mrb[0].mxu0
    %v587 = vadd.f32 0.0, %v586
    %v588 = vpop.f32.mrb[0].mxu0
    %589 = vdwg.mxu0
    %v590 = vadd.f32 %v519, %v587
    %v591 = vtanh.pop %v590
    %s592 = sadd.s32 %s198, 4
    %p593 = scmp.lt.s32.totalorder %s592, 8
    %s594 = scalar_select %p593, 1, 0
    %v595 = vstv %s594
    %vm596 = vcmp.eq.s32.totalorder %v595, 1
    %v597 = vsel %vm596, %v591, %v517
    %s598 = scalar_lea.vmem [#allocation3], 40
    %v599 = vld [vmem:[%s598] sm:$0xff]
    %600 = vmatprep.subr.mxu0 0.0
    %601 = vmatpush1.msra.mxu0 %v182
    %602 = vmatprep.subr.mxu0 0.0
    %603 = vmatpush1.msra.mxu0 %v183
    %604 = vmatprep.subr.mxu0 0.0
    %605 = vmatpush1.msra.mxu0 %v184
    %606 = vmatprep.subr.mxu0 0.0
    %607 = vmatpush1.msra.mxu0 %v185
    %608 = vmatprep.subr.mxu0 0.0
    %609 = vmatpush1.msra.mxu0 %v186
    %610 = vmatprep.subr.mxu0 0.0
    %611 = vmatpush1.msra.mxu0 %v187
    %612 = vmatprep.subr.mxu0 0.0
    %613 = vmatpush1.msra.mxu0 %v188
    %614 = vmatprep.subr.mxu0 0.0
    %615 = vmatpush1.msra.mxu0 %v189
    %616 = vmatprep.subr.mxu0 0.0
    %617 = vmatpush1.msra.mxu0 %v190
    %618 = vmatprep.subr.mxu0 0.0
    %619 = vmatpush1.msra.mxu0 %v191
    %620 = vmatprep.subr.mxu0 0.0
    %621 = vmatpush1.msra.mxu0 %v192
    %622 = vmatprep.subr.mxu0 0.0
    %623 = vmatpush1.msra.mxu0 %v193
    %624 = vmatprep.subr.mxu0 0.0
    %625 = vmatpush1.msra.mxu0 %v194
    %626 = vmatprep.subr.mxu0 0.0
    %627 = vmatpush1.msra.mxu0 %v195
    %628 = vmatprep.subr.mxu0 0.0
    %629 = vmatpush1.msra.mxu0 %v196
    %630 = vmatprep.subr.mxu0 0.0
    %631 = vmatpush1.msra.mxu0 %v197
    %632 = vmatprep.subr.mxu0 0.0
    %633 = vmatpush1.msra.mxu0 0.0
    %634 = vmatprep.subr.mxu0 0.0
    %635 = vmatpush1.msra.mxu0 0.0
    %636 = vmatprep.subr.mxu0 0.0
    %637 = vmatpush1.msra.mxu0 0.0
    %638 = vmatprep.subr.mxu0 0.0
    %639 = vmatpush1.msra.mxu0 0.0
    %640 = vmatprep.subr.mxu0 0.0
    %641 = vmatpush1.msra.mxu0 0.0
    %642 = vmatprep.subr.mxu0 0.0
    %643 = vmatpush1.msra.mxu0 0.0
    %644 = vmatprep.subr.mxu0 0.0
    %645 = vmatpush1.msra.mxu0 0.0
    %646 = vmatprep.subr.mxu0 0.0
    %647 = vmatpush1.msra.mxu0 0.0
    %648 = vmatprep.subr.mxu0 0.0
    %649 = vmatpush1.msra.mxu0 0.0
    %650 = vmatprep.subr.mxu0 0.0
    %651 = vmatpush1.msra.mxu0 0.0
    %652 = vmatprep.subr.mxu0 0.0
    %653 = vmatpush1.msra.mxu0 0.0
    %654 = vmatprep.subr.mxu0 0.0
    %655 = vmatpush1.msra.mxu0 0.0
    %656 = vmatprep.subr.mxu0 0.0
    %657 = vmatpush1.msra.mxu0 0.0
    %658 = vmatprep.subr.mxu0 0.0
    %659 = vmatpush1.msra.mxu0 0.0
    %660 = vmatprep.subr.mxu0 0.0
    %661 = vmatpush1.msra.mxu0 0.0
    %662 = vmatprep.subr.mxu0 0.0
    %663 = vmatpush1.msra.mxu0 0.0
    %664 = vmatprep.mubr.f32.mxu0 0.0
    %665 = vmatmul.mubr.f32.gmra.mrb[0].mxu0 %v597
    %v666 = vpop.f32.mrb[0].mxu0
    %v667 = vadd.f32 0.0, %v666
    %v668 = vpop.f32.mrb[0].mxu0
    %669 = vdwg.mxu0
    %v670 = vadd.f32 %v599, %v667
    %v671 = vtanh.pop %v670
    %s672 = sadd.s32 %s198, 5
    %p673 = scmp.lt.s32.totalorder %s672, 8
    %s674 = scalar_select %p673, 1, 0
    %v675 = vstv %s674
    %vm676 = vcmp.eq.s32.totalorder %v675, 1
    %v677 = vsel %vm676, %v671, %v597
    %s678 = scalar_lea.vmem [#allocation3], 48
    %v679 = vld [vmem:[%s678] sm:$0xff]
    %680 = vmatprep.subr.mxu0 0.0
    %681 = vmatpush1.msra.mxu0 %v182
    %682 = vmatprep.subr.mxu0 0.0
    %683 = vmatpush1.msra.mxu0 %v183
    %684 = vmatprep.subr.mxu0 0.0
    %685 = vmatpush1.msra.mxu0 %v184
    %686 = vmatprep.subr.mxu0 0.0
    %687 = vmatpush1.msra.mxu0 %v185
    %688 = vmatprep.subr.mxu0 0.0
    %689 = vmatpush1.msra.mxu0 %v186
    %690 = vmatprep.subr.mxu0 0.0
    %691 = vmatpush1.msra.mxu0 %v187
    %692 = vmatprep.subr.mxu0 0.0
    %693 = vmatpush1.msra.mxu0 %v188
    %694 = vmatprep.subr.mxu0 0.0
    %695 = vmatpush1.msra.mxu0 %v189
    %696 = vmatprep.subr.mxu0 0.0
    %697 = vmatpush1.msra.mxu0 %v190
    %698 = vmatprep.subr.mxu0 0.0
    %699 = vmatpush1.msra.mxu0 %v191
    %700 = vmatprep.subr.mxu0 0.0
    %701 = vmatpush1.msra.mxu0 %v192
    %702 = vmatprep.subr.mxu0 0.0
    %703 = vmatpush1.msra.mxu0 %v193
    %704 = vmatprep.subr.mxu0 0.0
    %705 = vmatpush1.msra.mxu0 %v194
    %706 = vmatprep.subr.mxu0 0.0
    %707 = vmatpush1.msra.mxu0 %v195
    %708 = vmatprep.subr.mxu0 0.0
    %709 = vmatpush1.msra.mxu0 %v196
    %710 = vmatprep.subr.mxu0 0.0
    %711 = vmatpush1.msra.mxu0 %v197
    %712 = vmatprep.subr.mxu0 0.0
    %713 = vmatpush1.msra.mxu0 0.0
    %714 = vmatprep.subr.mxu0 0.0
    %715 = vmatpush1.msra.mxu0 0.0
    %716 = vmatprep.subr.mxu0 0.0
    %717 = vmatpush1.msra.mxu0 0.0
    %718 = vmatprep.subr.mxu0 0.0
    %719 = vmatpush1.msra.mxu0 0.0
    %720 = vmatprep.subr.mxu0 0.0
    %721 = vmatpush1.msra.mxu0 0.0
    %722 = vmatprep.subr.mxu0 0.0
    %723 = vmatpush1.msra.mxu0 0.0
    %724 = vmatprep.subr.mxu0 0.0
    %725 = vmatpush1.msra.mxu0 0.0
    %726 = vmatprep.subr.mxu0 0.0
    %727 = vmatpush1.msra.mxu0 0.0
    %728 = vmatprep.subr.mxu0 0.0
    %729 = vmatpush1.msra.mxu0 0.0
    %730 = vmatprep.subr.mxu0 0.0
    %731 = vmatpush1.msra.mxu0 0.0
    %732 = vmatprep.subr.mxu0 0.0
    %733 = vmatpush1.msra.mxu0 0.0
    %734 = vmatprep.subr.mxu0 0.0
    %735 = vmatpush1.msra.mxu0 0.0
    %736 = vmatprep.subr.mxu0 0.0
    %737 = vmatpush1.msra.mxu0 0.0
    %738 = vmatprep.subr.mxu0 0.0
    %739 = vmatpush1.msra.mxu0 0.0
    %740 = vmatprep.subr.mxu0 0.0
    %741 = vmatpush1.msra.mxu0 0.0
    %742 = vmatprep.subr.mxu0 0.0
    %743 = vmatpush1.msra.mxu0 0.0
    %744 = vmatprep.mubr.f32.mxu0 0.0
    %745 = vmatmul.mubr.f32.gmra.mrb[0].mxu0 %v677
    %v746 = vpop.f32.mrb[0].mxu0
    %v747 = vadd.f32 0.0, %v746
    %v748 = vpop.f32.mrb[0].mxu0
    %749 = vdwg.mxu0
    %v750 = vadd.f32 %v679, %v747
    %v751 = vtanh.pop %v750
    %s752 = sadd.s32 %s198, 6
    %p753 = scmp.lt.s32.totalorder %s752, 8
    %s754 = scalar_select %p753, 1, 0
    %v755 = vstv %s754
    %vm756 = vcmp.eq.s32.totalorder %v755, 1
    %v757 = vsel %vm756, %v751, %v677
    %s758 = scalar_lea.vmem [#allocation3], 56
    %v759 = vld [vmem:[%s758] sm:$0xff]
    %760 = vmatprep.subr.mxu0 0.0
    %761 = vmatpush1.msra.mxu0 %v182
    %762 = vmatprep.subr.mxu0 0.0
    %763 = vmatpush1.msra.mxu0 %v183
    %764 = vmatprep.subr.mxu0 0.0
    %765 = vmatpush1.msra.mxu0 %v184
    %766 = vmatprep.subr.mxu0 0.0
    %767 = vmatpush1.msra.mxu0 %v185
    %768 = vmatprep.subr.mxu0 0.0
    %769 = vmatpush1.msra.mxu0 %v186
    %770 = vmatprep.subr.mxu0 0.0
    %771 = vmatpush1.msra.mxu0 %v187
    %772 = vmatprep.subr.mxu0 0.0
    %773 = vmatpush1.msra.mxu0 %v188
    %774 = vmatprep.subr.mxu0 0.0
    %775 = vmatpush1.msra.mxu0 %v189
    %776 = vmatprep.subr.mxu0 0.0
    %777 = vmatpush1.msra.mxu0 %v190
    %778 = vmatprep.subr.mxu0 0.0
    %779 = vmatpush1.msra.mxu0 %v191
    %780 = vmatprep.subr.mxu0 0.0
    %781 = vmatpush1.msra.mxu0 %v192
    %782 = vmatprep.subr.mxu0 0.0
    %783 = vmatpush1.msra.mxu0 %v193
    %784 = vmatprep.subr.mxu0 0.0
    %785 = vmatpush1.msra.mxu0 %v194
    %786 = vmatprep.subr.mxu0 0.0
    %787 = vmatpush1.msra.mxu0 %v195
    %788 = vmatprep.subr.mxu0 0.0
    %789 = vmatpush1.msra.mxu0 %v196
    %790 = vmatprep.subr.mxu0 0.0
    %791 = vmatpush1.msra.mxu0 %v197
    %792 = vmatprep.subr.mxu0 0.0
    %793 = vmatpush1.msra.mxu0 0.0
    %794 = vmatprep.subr.mxu0 0.0
    %795 = vmatpush1.msra.mxu0 0.0
    %796 = vmatprep.subr.mxu0 0.0
    %797 = vmatpush1.msra.mxu0 0.0
    %798 = vmatprep.subr.mxu0 0.0
    %799 = vmatpush1.msra.mxu0 0.0
    %800 = vmatprep.subr.mxu0 0.0
    %801 = vmatpush1.msra.mxu0 0.0
    %802 = vmatprep.subr.mxu0 0.0
    %803 = vmatpush1.msra.mxu0 0.0
    %804 = vmatprep.subr.mxu0 0.0
    %805 = vmatpush1.msra.mxu0 0.0
    %806 = vmatprep.subr.mxu0 0.0
    %807 = vmatpush1.msra.mxu0 0.0
    %808 = vmatprep.subr.mxu0 0.0
    %809 = vmatpush1.msra.mxu0 0.0
    %810 = vmatprep.subr.mxu0 0.0
    %811 = vmatpush1.msra.mxu0 0.0
    %812 = vmatprep.subr.mxu0 0.0
    %813 = vmatpush1.msra.mxu0 0.0
    %814 = vmatprep.subr.mxu0 0.0
    %815 = vmatpush1.msra.mxu0 0.0
    %816 = vmatprep.subr.mxu0 0.0
    %817 = vmatpush1.msra.mxu0 0.0
    %818 = vmatprep.subr.mxu0 0.0
    %819 = vmatpush1.msra.mxu0 0.0
    %820 = vmatprep.subr.mxu0 0.0
    %821 = vmatpush1.msra.mxu0 0.0
    %822 = vmatprep.subr.mxu0 0.0
    %823 = vmatpush1.msra.mxu0 0.0
    %824 = vmatprep.mubr.f32.mxu0 0.0
    %825 = vmatmul.mubr.f32.gmra.mrb[0].mxu0 %v757
    %v826 = vpop.f32.mrb[0].mxu0
    %v827 = vadd.f32 0.0, %v826
    %v828 = vpop.f32.mrb[0].mxu0
    %829 = vdwg.mxu0
    %v830 = vadd.f32 %v759, %v827
    %v831 = vtanh.pop %v830
    %s832 = sadd.s32 %s198, 7
    %p833 = scmp.lt.s32.totalorder %s832, 8
    %s834 = scalar_select %p833, 1, 0
    %v835 = vstv %s834
    %vm836 = vcmp.eq.s32.totalorder %v835, 1
    %v837 = vsel %vm836, %v831, %v757
    %838 = vst [vmem:[#allocation2] sm:$0xff] %v837
    // Predicated region
    $region22: #{tpu_custom_call.1} parent=1 // pred_check
      %p839 = pneg %p29
    $region23: #{tpu_custom_call.1} parent=1 // pred_check_branch
      %841 = sbr.rel (%p839) target = $region25
    $region24: #{tpu_custom_call.1} parent=1 // pred_region
      %842 = vst [vmem:[#allocation7] sm:$0xff] %v837
    $region25: #{tpu_custom_call.1} parent=1 // pred_fallthru
      _
    // Predicated region
    $region26: #{tpu_custom_call.1} parent=1 // pred_check
      _
    $region27: #{tpu_custom_call.1} parent=1 // pred_check_branch
      %844 = sbr.rel (0) target = $region29
    $region28: #{tpu_custom_call.1} parent=1 // pred_region
      %s846 = ssub.s32 128, 128
      %847 = vsyncadd [#allocation6], %s846
      %s849 = sshll.u32 [#allocation7], 4
      %s850 = int_to_ptr.vmem [resolvable:$true] %s849
      %852 = dma.vmem_to_hbm [thread:$0]  %s850, 128, %s3, [#allocation6]
    $region29: #{tpu_custom_call.1} parent=1 // pred_fallthru
      _
    // Predicated region
    $region30: #{tpu_custom_call.1} parent=1 // pred_check
      _
    $region31: #{tpu_custom_call.1} parent=1 // pred_check_branch
      %854 = sbr.rel (0) target = $region33
    $region32: #{tpu_custom_call.1} parent=1 // pred_region
      %855 = dma.done [#allocation6], 128
    $region33: #{tpu_custom_call.1} parent=1 // pred_fallthru
      _
    %856 = vsyncpa [#allocation5], 1
    %857 = vsyncpa [#allocation6], 1

// kernel: tpu_custom_call.1
$region0: #{tpu_custom_call.1}
  #allocation0 [shape = 'u32[]', space=smem, size = 0x4, offset = 0x4, fixed_abs, tag = 'smem constant byte address 0x4 - core index']
  #allocation1 [shape = 'u32[144,128]{1,0:T(1,128)}', space=vmem, size = 0x12000, scoped, tag = 'internal scratch']
  #allocation2 [shape = 'f32[8,128]{1,0:T(8,128)}', space=vmem, size = 0x1000, scoped, tag = 'scratch operand']
  #allocation3 [shape = 'f32[8,8,128]{2,1,0:T(8,128)}', space=vmem, size = 0x8000, scoped, tag = 'scratch operand']
  %s0 = inlined_call_operand.vmem [shape: f32[64,16], index: 0, kind: input, shape index: {}]
  %s1 = inlined_call_operand.vmem [shape: f32[16,128], index: 1, kind: input, shape index: {}]
  %s2 = inlined_call_operand.hbm [shape: f32[128,128], index: 2, kind: input, shape index: {}]
  %s3 = inlined_call_operand.hbm [shape: f32[8,128], index: 3, kind: output, shape index: {}]
  %s4 = sld [smem:[#allocation0]]
  $region34: #{tpu_custom_call.1} parent=0
    _
  %s6 = ssub.s32 1, %s4
  %s7 = scalar_select 0, %s6, %s4
  $region1: #{tpu_custom_call.1} parent=0
    #allocation4 [shape = 'u8[65536]{0}', space=vmem, size = 0x10000, scoped, tag = 'input window, operand 2, single buffered']
    #allocation5 [shape = 's32[1]{0}', space=sflag, size = 0x4, scoped, tag = 'scoped memory for tpu_custom_call.1']
    #allocation6 [shape = 's32[1]{0}', space=sflag, size = 0x4, scoped, tag = 'scoped memory for tpu_custom_call.1']
    #allocation7 [shape = 'u8[4096]{0}', space=vmem, size = 0x1000, scoped, tag = 'output window, operand 0, single buffered']
    %8 = vsyncpa [#allocation5], 0
    %9 = vsyncpa [#allocation6], 0
    // Predicated region
    $region2: #{tpu_custom_call.1} parent=1 // pred_check
      _
    $region3: #{tpu_custom_call.1} parent=1 // pred_check_branch
      %11 = sbr.rel (0) target = $region5
    $region4: #{tpu_custom_call.1} parent=1 // pred_region
      _
    $region5: #{tpu_custom_call.1} parent=1 // pred_fallthru
      _
    // Predicated region
    $region6: #{tpu_custom_call.1} parent=1 // pred_check
      _
    $region7: #{tpu_custom_call.1} parent=1 // pred_check_branch
      %13 = sbr.rel (0) target = $region9
    $region8: #{tpu_custom_call.1} parent=1 // pred_region
      _
    $region9: #{tpu_custom_call.1} parent=1 // pred_fallthru
      _
    // Predicated region
    $region10: #{tpu_custom_call.1} parent=1 // pred_check
      _
    $region11: #{tpu_custom_call.1} parent=1 // pred_check_branch
      %15 = sbr.rel (0) target = $region13
    $region12: #{tpu_custom_call.1} parent=1 // pred_region
      %s17 = ssub.s32 2048, 2048
      %18 = vsyncadd [#allocation5], %s17
      %s19 = sshll.u32 [#allocation4], 4
      %s20 = int_to_ptr.vmem [resolvable:$true] %s19
      %25 = dma.hbm_to_vmem [thread:$0]  %s2, 2048, %s20, [#allocation5], 128, 128, 8
    $region13: #{tpu_custom_call.1} parent=1 // pred_fallthru
      _
    // Predicated region
    $region14: #{tpu_custom_call.1} parent=1 // pred_check
      _
    $region15: #{tpu_custom_call.1} parent=1 // pred_check_branch
      %27 = sbr.rel (0) target = $region17
    $region16: #{tpu_custom_call.1} parent=1 // pred_region
      %28 = dma.done [#allocation5], 2048
    $region17: #{tpu_custom_call.1} parent=1 // pred_fallthru
      _
    %p29 = scmp.eq.s32.totalorder 0, 0
    // Predicated region
    $region18: #{tpu_custom_call.1} parent=1 // pred_check
      %p30 = pneg %p29
    $region19: #{tpu_custom_call.1} parent=1 // pred_check_branch
      %32 = sbr.rel (%p30) target = $region21
    $region20: #{tpu_custom_call.1} parent=1 // pred_region
      %33 = vst [vmem:[#allocation2] sm:$0xff] 0.0
    $region21: #{tpu_custom_call.1} parent=1 // pred_fallthru
      _
    %v34 = vld [vmem:[%s0] sm:$0xff]
    %v35 = vld [vmem:[%s0 + $0x8] sm:$0xff]
    %v36 = vld [vmem:[%s0 + $0x10] sm:$0xff]
    %v37 = vld [vmem:[%s0 + $0x18] sm:$0xff]
    %v38 = vld [vmem:[%s0 + $0x20] sm:$0xff]
    %v39 = vld [vmem:[%s0 + $0x28] sm:$0xff]
    %v40 = vld [vmem:[%s0 + $0x30] sm:$0xff]
    %v41 = vld [vmem:[%s0 + $0x38] sm:$0xff]
    %v42 = vld [vmem:[%s1] sm:$0xff]
    %v43 = vld [vmem:[%s1 + $0x8] sm:$0xff]
    %vm44 = vcmask 130048
    %v46 = vsel %vm44, %v34, 0
    %v49 = vsel %vm44, %v35, 0
    %v52 = vsel %vm44, %v36, 0
    %v55 = vsel %vm44, %v37, 0
    %v58 = vsel %vm44, %v38, 0
    %v61 = vsel %vm44, %v39, 0
    %v64 = vsel %vm44, %v40, 0
    %v67 = vsel %vm44, %v41, 0
    %69 = vmatprep.subr.mxu0 0.0
    %70 = vmatpush1.msra.mxu0 %v42
    %71 = vmatprep.subr.mxu0 0.0
    %72 = vmatpush1.msra.mxu0 %v43
    %73 = vmatprep.subr.mxu0 0.0
    %74 = vmatpush1.msra.mxu0 0.0
    %75 = vmatprep.subr.mxu0 0.0
    %76 = vmatpush1.msra.mxu0 0.0
    %77 = vmatprep.subr.mxu0 0.0
    %78 = vmatpush1.msra.mxu0 0.0
    %79 = vmatprep.subr.mxu0 0.0
    %80 = vmatpush1.msra.mxu0 0.0
    %81 = vmatprep.subr.mxu0 0.0
    %82 = vmatpush1.msra.mxu0 0.0
    %83 = vmatprep.subr.mxu0 0.0
    %84 = vmatpush1.msra.mxu0 0.0
    %85 = vmatprep.subr.mxu0 0.0
    %86 = vmatpush1.msra.mxu0 0.0
    %87 = vmatprep.subr.mxu0 0.0
    %88 = vmatpush1.msra.mxu0 0.0
    %89 = vmatprep.subr.mxu0 0.0
    %90 = vmatpush1.msra.mxu0 0.0
    %91 = vmatprep.subr.mxu0 0.0
    %92 = vmatpush1.msra.mxu0 0.0
    %93 = vmatprep.subr.mxu0 0.0
    %94 = vmatpush1.msra.mxu0 0.0
    %95 = vmatprep.subr.mxu0 0.0
    %96 = vmatpush1.msra.mxu0 0.0
    %97 = vmatprep.subr.mxu0 0.0
    %98 = vmatpush1.msra.mxu0 0.0
    %99 = vmatprep.subr.mxu0 0.0
    %100 = vmatpush1.msra.mxu0 0.0
    %101 = vmatprep.subr.mxu0 0.0
    %102 = vmatpush1.msra.mxu0 0.0
    %103 = vmatprep.subr.mxu0 0.0
    %104 = vmatpush1.msra.mxu0 0.0
    %105 = vmatprep.subr.mxu0 0.0
    %106 = vmatpush1.msra.mxu0 0.0
    %107 = vmatprep.subr.mxu0 0.0
    %108 = vmatpush1.msra.mxu0 0.0
    %109 = vmatprep.subr.mxu0 0.0
    %110 = vmatpush1.msra.mxu0 0.0
    %111 = vmatprep.subr.mxu0 0.0
    %112 = vmatpush1.msra.mxu0 0.0
    %113 = vmatprep.subr.mxu0 0.0
    %114 = vmatpush1.msra.mxu0 0.0
    %115 = vmatprep.subr.mxu0 0.0
    %116 = vmatpush1.msra.mxu0 0.0
    %117 = vmatprep.subr.mxu0 0.0
    %118 = vmatpush1.msra.mxu0 0.0
    %119 = vmatprep.subr.mxu0 0.0
    %120 = vmatpush1.msra.mxu0 0.0
    %121 = vmatprep.subr.mxu0 0.0
    %122 = vmatpush1.msra.mxu0 0.0
    %123 = vmatprep.subr.mxu0 0.0
    %124 = vmatpush1.msra.mxu0 0.0
    %125 = vmatprep.subr.mxu0 0.0
    %126 = vmatpush1.msra.mxu0 0.0
    %127 = vmatprep.subr.mxu0 0.0
    %128 = vmatpush1.msra.mxu0 0.0
    %129 = vmatprep.subr.mxu0 0.0
    %130 = vmatpush1.msra.mxu0 0.0
    %131 = vmatprep.subr.mxu0 0.0
    %132 = vmatpush1.msra.mxu0 0.0
    %133 = vmatprep.mubr.f32.mxu0 0.0
    %134 = vmatmul.mubr.f32.gmra.mrb[0].mxu0 %v46
    %v135 = vpop.f32.mrb[0].mxu0
    %v136 = vadd.f32 0.0, %v135
    %v137 = vpop.f32.mrb[0].mxu0
    %138 = vmatprep.mubr.f32.mxu0 0.0
    %139 = vmatmul.mubr.f32.gmra.mrb[0].mxu0 %v49
    %v140 = vpop.f32.mrb[0].mxu0
    %v141 = vadd.f32 0.0, %v140
    %v142 = vpop.f32.mrb[0].mxu0
    %143 = vmatprep.mubr.f32.mxu0 0.0
    %144 = vmatmul.mubr.f32.gmra.mrb[0].mxu0 %v52
    %v145 = vpop.f32.mrb[0].mxu0
    %v146 = vadd.f32 0.0, %v145
    %v147 = vpop.f32.mrb[0].mxu0
    %148 = vmatprep.mubr.f32.mxu0 0.0
    %149 = vmatmul.mubr.f32.gmra.mrb[0].mxu0 %v55
    %v150 = vpop.f32.mrb[0].mxu0
    %v151 = vadd.f32 0.0, %v150
    %v152 = vpop.f32.mrb[0].mxu0
    %153 = vmatprep.mubr.f32.mxu0 0.0
    %154 = vmatmul.mubr.f32.gmra.mrb[0].mxu0 %v58
    %v155 = vpop.f32.mrb[0].mxu0
    %v156 = vadd.f32 0.0, %v155
    %v157 = vpop.f32.mrb[0].mxu0
    %158 = vmatprep.mubr.f32.mxu0 0.0
    %159 = vmatmul.mubr.f32.gmra.mrb[0].mxu0 %v61
    %v160 = vpop.f32.mrb[0].mxu0
    %v161 = vadd.f32 0.0, %v160
    %v162 = vpop.f32.mrb[0].mxu0
    %163 = vmatprep.mubr.f32.mxu0 0.0
    %164 = vmatmul.mubr.f32.gmra.mrb[0].mxu0 %v64
    %v165 = vpop.f32.mrb[0].mxu0
    %v166 = vadd.f32 0.0, %v165
    %v167 = vpop.f32.mrb[0].mxu0
    %168 = vmatprep.mubr.f32.mxu0 0.0
    %169 = vmatmul.mubr.f32.gmra.mrb[0].mxu0 %v67
    %v170 = vpop.f32.mrb[0].mxu0
    %v171 = vadd.f32 0.0, %v170
    %v172 = vpop.f32.mrb[0].mxu0
    %173 = vdwg.mxu0
    %174 = vst [vmem:[#allocation3] sm:$0xff] %v136
    %175 = vst [vmem:[#allocation3 + $0x8] sm:$0xff] %v141
    %176 = vst [vmem:[#allocation3 + $0x10] sm:$0xff] %v146
    %177 = vst [vmem:[#allocation3 + $0x18] sm:$0xff] %v151
    %178 = vst [vmem:[#allocation3 + $0x20] sm:$0xff] %v156
    %179 = vst [vmem:[#allocation3 + $0x28] sm:$0xff] %v161
    %180 = vst [vmem:[#allocation3 + $0x30] sm:$0xff] %v166
    %181 = vst [vmem:[#allocation3 + $0x38] sm:$0xff] %v171
    %v182 = vld [vmem:[#allocation4] sm:$0xff]
    %v183 = vld [vmem:[#allocation4 + $0x8] sm:$0xff]
    %v184 = vld [vmem:[#allocation4 + $0x10] sm:$0xff]
    %v185 = vld [vmem:[#allocation4 + $0x18] sm:$0xff]
    %v186 = vld [vmem:[#allocation4 + $0x20] sm:$0xff]
    %v187 = vld [vmem:[#allocation4 + $0x28] sm:$0xff]
    %v188 = vld [vmem:[#allocation4 + $0x30] sm:$0xff]
    %v189 = vld [vmem:[#allocation4 + $0x38] sm:$0xff]
    %v190 = vld [vmem:[#allocation4 + $0x40] sm:$0xff]
    %v191 = vld [vmem:[#allocation4 + $0x48] sm:$0xff]
    %v192 = vld [vmem:[#allocation4 + $0x50] sm:$0xff]
    %v193 = vld [vmem:[#allocation4 + $0x58] sm:$0xff]
    %v194 = vld [vmem:[#allocation4 + $0x60] sm:$0xff]
    %v195 = vld [vmem:[#allocation4 + $0x68] sm:$0xff]
    %v196 = vld [vmem:[#allocation4 + $0x70] sm:$0xff]
    %v197 = vld [vmem:[#allocation4 + $0x78] sm:$0xff]
    %s198 = smul.u32 0, 8
    %v199 = vld [vmem:[#allocation2] sm:$0xff]
    %v200 = vld [vmem:[#allocation3] sm:$0xff]
    %201 = vmatprep.subr.mxu0 0.0
    %202 = vmatpush1.msra.mxu0 %v182
    %203 = vmatprep.subr.mxu0 0.0
    %204 = vmatpush1.msra.mxu0 %v183
    %205 = vmatprep.subr.mxu0 0.0
    %206 = vmatpush1.msra.mxu0 %v184
    %207 = vmatprep.subr.mxu0 0.0
    %208 = vmatpush1.msra.mxu0 %v185
    %209 = vmatprep.subr.mxu0 0.0
    %210 = vmatpush1.msra.mxu0 %v186
    %211 = vmatprep.subr.mxu0 0.0
    %212 = vmatpush1.msra.mxu0 %v187
    %213 = vmatprep.subr.mxu0 0.0
    %214 = vmatpush1.msra.mxu0 %v188
    %215 = vmatprep.subr.mxu0 0.0
    %216 = vmatpush1.msra.mxu0 %v189
    %217 = vmatprep.subr.mxu0 0.0
    %218 = vmatpush1.msra.mxu0 %v190
    %219 = vmatprep.subr.mxu0 0.0
    %220 = vmatpush1.msra.mxu0 %v191
    %221 = vmatprep.subr.mxu0 0.0
    %222 = vmatpush1.msra.mxu0 %v192
    %223 = vmatprep.subr.mxu0 0.0
    %224 = vmatpush1.msra.mxu0 %v193
    %225 = vmatprep.subr.mxu0 0.0
    %226 = vmatpush1.msra.mxu0 %v194
    %227 = vmatprep.subr.mxu0 0.0
    %228 = vmatpush1.msra.mxu0 %v195
    %229 = vmatprep.subr.mxu0 0.0
    %230 = vmatpush1.msra.mxu0 %v196
    %231 = vmatprep.subr.mxu0 0.0
    %232 = vmatpush1.msra.mxu0 %v197
    %233 = vmatprep.subr.mxu0 0.0
    %234 = vmatpush1.msra.mxu0 0.0
    %235 = vmatprep.subr.mxu0 0.0
    %236 = vmatpush1.msra.mxu0 0.0
    %237 = vmatprep.subr.mxu0 0.0
    %238 = vmatpush1.msra.mxu0 0.0
    %239 = vmatprep.subr.mxu0 0.0
    %240 = vmatpush1.msra.mxu0 0.0
    %241 = vmatprep.subr.mxu0 0.0
    %242 = vmatpush1.msra.mxu0 0.0
    %243 = vmatprep.subr.mxu0 0.0
    %244 = vmatpush1.msra.mxu0 0.0
    %245 = vmatprep.subr.mxu0 0.0
    %246 = vmatpush1.msra.mxu0 0.0
    %247 = vmatprep.subr.mxu0 0.0
    %248 = vmatpush1.msra.mxu0 0.0
    %249 = vmatprep.subr.mxu0 0.0
    %250 = vmatpush1.msra.mxu0 0.0
    %251 = vmatprep.subr.mxu0 0.0
    %252 = vmatpush1.msra.mxu0 0.0
    %253 = vmatprep.subr.mxu0 0.0
    %254 = vmatpush1.msra.mxu0 0.0
    %255 = vmatprep.subr.mxu0 0.0
    %256 = vmatpush1.msra.mxu0 0.0
    %257 = vmatprep.subr.mxu0 0.0
    %258 = vmatpush1.msra.mxu0 0.0
    %259 = vmatprep.subr.mxu0 0.0
    %260 = vmatpush1.msra.mxu0 0.0
    %261 = vmatprep.subr.mxu0 0.0
    %262 = vmatpush1.msra.mxu0 0.0
    %263 = vmatprep.subr.mxu0 0.0
    %264 = vmatpush1.msra.mxu0 0.0
    %265 = vmatprep.mubr.f32.mxu0 0.0
    %266 = vmatmul.mubr.f32.gmra.mrb[0].mxu0 %v199
    %v267 = vpop.f32.mrb[0].mxu0
    %v268 = vadd.f32 0.0, %v267
    %v269 = vpop.f32.mrb[0].mxu0
    %270 = vdwg.mxu0
    %v271 = vadd.f32 %v200, %v268
    %v272 = vtanh.pop %v271
    %p273 = scmp.lt.s32.totalorder %s198, 8
    %s274 = scalar_select %p273, 1, 0
    %v275 = vstv %s274
    %vm276 = vcmp.eq.s32.totalorder %v275, 1
    %v277 = vsel %vm276, %v272, %v199
    %s278 = scalar_lea.vmem [#allocation3], 8
    %v279 = vld [vmem:[%s278] sm:$0xff]
    %280 = vmatprep.subr.mxu0 0.0
    %281 = vmatpush1.msra.mxu0 %v182
    %282 = vmatprep.subr.mxu0 0.0
    %283 = vmatpush1.msra.mxu0 %v183
    %284 = vmatprep.subr.mxu0 0.0
    %285 = vmatpush1.msra.mxu0 %v184
    %286 = vmatprep.subr.mxu0 0.0
    %287 = vmatpush1.msra.mxu0 %v185
    %288 = vmatprep.subr.mxu0 0.0
    %289 = vmatpush1.msra.mxu0 %v186
    %290 = vmatprep.subr.mxu0 0.0
    %291 = vmatpush1.msra.mxu0 %v187
    %292 = vmatprep.subr.mxu0 0.0
    %293 = vmatpush1.msra.mxu0 %v188
    %294 = vmatprep.subr.mxu0 0.0
    %295 = vmatpush1.msra.mxu0 %v189
    %296 = vmatprep.subr.mxu0 0.0
    %297 = vmatpush1.msra.mxu0 %v190
    %298 = vmatprep.subr.mxu0 0.0
    %299 = vmatpush1.msra.mxu0 %v191
    %300 = vmatprep.subr.mxu0 0.0
    %301 = vmatpush1.msra.mxu0 %v192
    %302 = vmatprep.subr.mxu0 0.0
    %303 = vmatpush1.msra.mxu0 %v193
    %304 = vmatprep.subr.mxu0 0.0
    %305 = vmatpush1.msra.mxu0 %v194
    %306 = vmatprep.subr.mxu0 0.0
    %307 = vmatpush1.msra.mxu0 %v195
    %308 = vmatprep.subr.mxu0 0.0
    %309 = vmatpush1.msra.mxu0 %v196
    %310 = vmatprep.subr.mxu0 0.0
    %311 = vmatpush1.msra.mxu0 %v197
    %312 = vmatprep.subr.mxu0 0.0
    %313 = vmatpush1.msra.mxu0 0.0
    %314 = vmatprep.subr.mxu0 0.0
    %315 = vmatpush1.msra.mxu0 0.0
    %316 = vmatprep.subr.mxu0 0.0
    %317 = vmatpush1.msra.mxu0 0.0
    %318 = vmatprep.subr.mxu0 0.0
    %319 = vmatpush1.msra.mxu0 0.0
    %320 = vmatprep.subr.mxu0 0.0
    %321 = vmatpush1.msra.mxu0 0.0
    %322 = vmatprep.subr.mxu0 0.0
    %323 = vmatpush1.msra.mxu0 0.0
    %324 = vmatprep.subr.mxu0 0.0
    %325 = vmatpush1.msra.mxu0 0.0
    %326 = vmatprep.subr.mxu0 0.0
    %327 = vmatpush1.msra.mxu0 0.0
    %328 = vmatprep.subr.mxu0 0.0
    %329 = vmatpush1.msra.mxu0 0.0
    %330 = vmatprep.subr.mxu0 0.0
    %331 = vmatpush1.msra.mxu0 0.0
    %332 = vmatprep.subr.mxu0 0.0
    %333 = vmatpush1.msra.mxu0 0.0
    %334 = vmatprep.subr.mxu0 0.0
    %335 = vmatpush1.msra.mxu0 0.0
    %336 = vmatprep.subr.mxu0 0.0
    %337 = vmatpush1.msra.mxu0 0.0
    %338 = vmatprep.subr.mxu0 0.0
    %339 = vmatpush1.msra.mxu0 0.0
    %340 = vmatprep.subr.mxu0 0.0
    %341 = vmatpush1.msra.mxu0 0.0
    %342 = vmatprep.subr.mxu0 0.0
    %343 = vmatpush1.msra.mxu0 0.0
    %344 = vmatprep.mubr.f32.mxu0 0.0
    %345 = vmatmul.mubr.f32.gmra.mrb[0].mxu0 %v277
    %v346 = vpop.f32.mrb[0].mxu0
    %v347 = vadd.f32 0.0, %v346
    %v348 = vpop.f32.mrb[0].mxu0
    %349 = vdwg.mxu0
    %v350 = vadd.f32 %v279, %v347
    %v351 = vtanh.pop %v350
    %s352 = sadd.s32 %s198, 1
    %p353 = scmp.lt.s32.totalorder %s352, 8
    %s354 = scalar_select %p353, 1, 0
    %v355 = vstv %s354
    %vm356 = vcmp.eq.s32.totalorder %v355, 1
    %v357 = vsel %vm356, %v351, %v277
    %s358 = scalar_lea.vmem [#allocation3], 16
    %v359 = vld [vmem:[%s358] sm:$0xff]
    %360 = vmatprep.subr.mxu0 0.0
    %361 = vmatpush1.msra.mxu0 %v182
    %362 = vmatprep.subr.mxu0 0.0
    %363 = vmatpush1.msra.mxu0 %v183
    %364 = vmatprep.subr.mxu0 0.0
    %365 = vmatpush1.msra.mxu0 %v184
    %366 = vmatprep.subr.mxu0 0.0
    %367 = vmatpush1.msra.mxu0 %v185
    %368 = vmatprep.subr.mxu0 0.0
    %369 = vmatpush1.msra.mxu0 %v186
    %370 = vmatprep.subr.mxu0 0.0
    %371 = vmatpush1.msra.mxu0 %v187
    %372 = vmatprep.subr.mxu0 0.0
    %373 = vmatpush1.msra.mxu0 %v188
    %374 = vmatprep.subr.mxu0 0.0
    %375 = vmatpush1.msra.mxu0 %v189
    %376 = vmatprep.subr.mxu0 0.0
    %377 = vmatpush1.msra.mxu0 %v190
    %378 = vmatprep.subr.mxu0 0.0
    %379 = vmatpush1.msra.mxu0 %v191
    %380 = vmatprep.subr.mxu0 0.0
    %381 = vmatpush1.msra.mxu0 %v192
    %382 = vmatprep.subr.mxu0 0.0
    %383 = vmatpush1.msra.mxu0 %v193
    %384 = vmatprep.subr.mxu0 0.0
    %385 = vmatpush1.msra.mxu0 %v194
    %386 = vmatprep.subr.mxu0 0.0
    %387 = vmatpush1.msra.mxu0 %v195
    %388 = vmatprep.subr.mxu0 0.0
    %389 = vmatpush1.msra.mxu0 %v196
    %390 = vmatprep.subr.mxu0 0.0
    %391 = vmatpush1.msra.mxu0 %v197
    %392 = vmatprep.subr.mxu0 0.0
    %393 = vmatpush1.msra.mxu0 0.0
    %394 = vmatprep.subr.mxu0 0.0
    %395 = vmatpush1.msra.mxu0 0.0
    %396 = vmatprep.subr.mxu0 0.0
    %397 = vmatpush1.msra.mxu0 0.0
    %398 = vmatprep.subr.mxu0 0.0
    %399 = vmatpush1.msra.mxu0 0.0
    %400 = vmatprep.subr.mxu0 0.0
    %401 = vmatpush1.msra.mxu0 0.0
    %402 = vmatprep.subr.mxu0 0.0
    %403 = vmatpush1.msra.mxu0 0.0
    %404 = vmatprep.subr.mxu0 0.0
    %405 = vmatpush1.msra.mxu0 0.0
    %406 = vmatprep.subr.mxu0 0.0
    %407 = vmatpush1.msra.mxu0 0.0
    %408 = vmatprep.subr.mxu0 0.0
    %409 = vmatpush1.msra.mxu0 0.0
    %410 = vmatprep.subr.mxu0 0.0
    %411 = vmatpush1.msra.mxu0 0.0
    %412 = vmatprep.subr.mxu0 0.0
    %413 = vmatpush1.msra.mxu0 0.0
    %414 = vmatprep.subr.mxu0 0.0
    %415 = vmatpush1.msra.mxu0 0.0
    %416 = vmatprep.subr.mxu0 0.0
    %417 = vmatpush1.msra.mxu0 0.0
    %418 = vmatprep.subr.mxu0 0.0
    %419 = vmatpush1.msra.mxu0 0.0
    %420 = vmatprep.subr.mxu0 0.0
    %421 = vmatpush1.msra.mxu0 0.0
    %422 = vmatprep.subr.mxu0 0.0
    %423 = vmatpush1.msra.mxu0 0.0
    %424 = vmatprep.mubr.f32.mxu0 0.0
    %425 = vmatmul.mubr.f32.gmra.mrb[0].mxu0 %v357
    %v426 = vpop.f32.mrb[0].mxu0
    %v427 = vadd.f32 0.0, %v426
    %v428 = vpop.f32.mrb[0].mxu0
    %429 = vdwg.mxu0
    %v430 = vadd.f32 %v359, %v427
    %v431 = vtanh.pop %v430
    %s432 = sadd.s32 %s198, 2
    %p433 = scmp.lt.s32.totalorder %s432, 8
    %s434 = scalar_select %p433, 1, 0
    %v435 = vstv %s434
    %vm436 = vcmp.eq.s32.totalorder %v435, 1
    %v437 = vsel %vm436, %v431, %v357
    %s438 = scalar_lea.vmem [#allocation3], 24
    %v439 = vld [vmem:[%s438] sm:$0xff]
    %440 = vmatprep.subr.mxu0 0.0
    %441 = vmatpush1.msra.mxu0 %v182
    %442 = vmatprep.subr.mxu0 0.0
    %443 = vmatpush1.msra.mxu0 %v183
    %444 = vmatprep.subr.mxu0 0.0
    %445 = vmatpush1.msra.mxu0 %v184
    %446 = vmatprep.subr.mxu0 0.0
    %447 = vmatpush1.msra.mxu0 %v185
    %448 = vmatprep.subr.mxu0 0.0
    %449 = vmatpush1.msra.mxu0 %v186
    %450 = vmatprep.subr.mxu0 0.0
    %451 = vmatpush1.msra.mxu0 %v187
    %452 = vmatprep.subr.mxu0 0.0
    %453 = vmatpush1.msra.mxu0 %v188
    %454 = vmatprep.subr.mxu0 0.0
    %455 = vmatpush1.msra.mxu0 %v189
    %456 = vmatprep.subr.mxu0 0.0
    %457 = vmatpush1.msra.mxu0 %v190
    %458 = vmatprep.subr.mxu0 0.0
    %459 = vmatpush1.msra.mxu0 %v191
    %460 = vmatprep.subr.mxu0 0.0
    %461 = vmatpush1.msra.mxu0 %v192
    %462 = vmatprep.subr.mxu0 0.0
    %463 = vmatpush1.msra.mxu0 %v193
    %464 = vmatprep.subr.mxu0 0.0
    %465 = vmatpush1.msra.mxu0 %v194
    %466 = vmatprep.subr.mxu0 0.0
    %467 = vmatpush1.msra.mxu0 %v195
    %468 = vmatprep.subr.mxu0 0.0
    %469 = vmatpush1.msra.mxu0 %v196
    %470 = vmatprep.subr.mxu0 0.0
    %471 = vmatpush1.msra.mxu0 %v197
    %472 = vmatprep.subr.mxu0 0.0
    %473 = vmatpush1.msra.mxu0 0.0
    %474 = vmatprep.subr.mxu0 0.0
    %475 = vmatpush1.msra.mxu0 0.0
    %476 = vmatprep.subr.mxu0 0.0
    %477 = vmatpush1.msra.mxu0 0.0
    %478 = vmatprep.subr.mxu0 0.0
    %479 = vmatpush1.msra.mxu0 0.0
    %480 = vmatprep.subr.mxu0 0.0
    %481 = vmatpush1.msra.mxu0 0.0
    %482 = vmatprep.subr.mxu0 0.0
    %483 = vmatpush1.msra.mxu0 0.0
    %484 = vmatprep.subr.mxu0 0.0
    %485 = vmatpush1.msra.mxu0 0.0
    %486 = vmatprep.subr.mxu0 0.0
    %487 = vmatpush1.msra.mxu0 0.0
    %488 = vmatprep.subr.mxu0 0.0
    %489 = vmatpush1.msra.mxu0 0.0
    %490 = vmatprep.subr.mxu0 0.0
    %491 = vmatpush1.msra.mxu0 0.0
    %492 = vmatprep.subr.mxu0 0.0
    %493 = vmatpush1.msra.mxu0 0.0
    %494 = vmatprep.subr.mxu0 0.0
    %495 = vmatpush1.msra.mxu0 0.0
    %496 = vmatprep.subr.mxu0 0.0
    %497 = vmatpush1.msra.mxu0 0.0
    %498 = vmatprep.subr.mxu0 0.0
    %499 = vmatpush1.msra.mxu0 0.0
    %500 = vmatprep.subr.mxu0 0.0
    %501 = vmatpush1.msra.mxu0 0.0
    %502 = vmatprep.subr.mxu0 0.0
    %503 = vmatpush1.msra.mxu0 0.0
    %504 = vmatprep.mubr.f32.mxu0 0.0
    %505 = vmatmul.mubr.f32.gmra.mrb[0].mxu0 %v437
    %v506 = vpop.f32.mrb[0].mxu0
    %v507 = vadd.f32 0.0, %v506
    %v508 = vpop.f32.mrb[0].mxu0
    %509 = vdwg.mxu0
    %v510 = vadd.f32 %v439, %v507
    %v511 = vtanh.pop %v510
    %s512 = sadd.s32 %s198, 3
    %p513 = scmp.lt.s32.totalorder %s512, 8
    %s514 = scalar_select %p513, 1, 0
    %v515 = vstv %s514
    %vm516 = vcmp.eq.s32.totalorder %v515, 1
    %v517 = vsel %vm516, %v511, %v437
    %s518 = scalar_lea.vmem [#allocation3], 32
    %v519 = vld [vmem:[%s518] sm:$0xff]
    %520 = vmatprep.subr.mxu0 0.0
    %521 = vmatpush1.msra.mxu0 %v182
    %522 = vmatprep.subr.mxu0 0.0
    %523 = vmatpush1.msra.mxu0 %v183
    %524 = vmatprep.subr.mxu0 0.0
    %525 = vmatpush1.msra.mxu0 %v184
    %526 = vmatprep.subr.mxu0 0.0
    %527 = vmatpush1.msra.mxu0 %v185
    %528 = vmatprep.subr.mxu0 0.0
    %529 = vmatpush1.msra.mxu0 %v186
    %530 = vmatprep.subr.mxu0 0.0
    %531 = vmatpush1.msra.mxu0 %v187
    %532 = vmatprep.subr.mxu0 0.0
    %533 = vmatpush1.msra.mxu0 %v188
    %534 = vmatprep.subr.mxu0 0.0
    %535 = vmatpush1.msra.mxu0 %v189
    %536 = vmatprep.subr.mxu0 0.0
    %537 = vmatpush1.msra.mxu0 %v190
    %538 = vmatprep.subr.mxu0 0.0
    %539 = vmatpush1.msra.mxu0 %v191
    %540 = vmatprep.subr.mxu0 0.0
    %541 = vmatpush1.msra.mxu0 %v192
    %542 = vmatprep.subr.mxu0 0.0
    %543 = vmatpush1.msra.mxu0 %v193
    %544 = vmatprep.subr.mxu0 0.0
    %545 = vmatpush1.msra.mxu0 %v194
    %546 = vmatprep.subr.mxu0 0.0
    %547 = vmatpush1.msra.mxu0 %v195
    %548 = vmatprep.subr.mxu0 0.0
    %549 = vmatpush1.msra.mxu0 %v196
    %550 = vmatprep.subr.mxu0 0.0
    %551 = vmatpush1.msra.mxu0 %v197
    %552 = vmatprep.subr.mxu0 0.0
    %553 = vmatpush1.msra.mxu0 0.0
    %554 = vmatprep.subr.mxu0 0.0
    %555 = vmatpush1.msra.mxu0 0.0
    %556 = vmatprep.subr.mxu0 0.0
    %557 = vmatpush1.msra.mxu0 0.0
    %558 = vmatprep.subr.mxu0 0.0
    %559 = vmatpush1.msra.mxu0 0.0
    %560 = vmatprep.subr.mxu0 0.0
    %561 = vmatpush1.msra.mxu0 0.0
    %562 = vmatprep.subr.mxu0 0.0
    %563 = vmatpush1.msra.mxu0 0.0
    %564 = vmatprep.subr.mxu0 0.0
    %565 = vmatpush1.msra.mxu0 0.0
    %566 = vmatprep.subr.mxu0 0.0
    %567 = vmatpush1.msra.mxu0 0.0
    %568 = vmatprep.subr.mxu0 0.0
    %569 = vmatpush1.msra.mxu0 0.0
    %570 = vmatprep.subr.mxu0 0.0
    %571 = vmatpush1.msra.mxu0 0.0
    %572 = vmatprep.subr.mxu0 0.0
    %573 = vmatpush1.msra.mxu0 0.0
    %574 = vmatprep.subr.mxu0 0.0
    %575 = vmatpush1.msra.mxu0 0.0
    %576 = vmatprep.subr.mxu0 0.0
    %577 = vmatpush1.msra.mxu0 0.0
    %578 = vmatprep.subr.mxu0 0.0
    %579 = vmatpush1.msra.mxu0 0.0
    %580 = vmatprep.subr.mxu0 0.0
    %581 = vmatpush1.msra.mxu0 0.0
    %582 = vmatprep.subr.mxu0 0.0
    %583 = vmatpush1.msra.mxu0 0.0
    %584 = vmatprep.mubr.f32.mxu0 0.0
    %585 = vmatmul.mubr.f32.gmra.mrb[0].mxu0 %v517
    %v586 = vpop.f32.mrb[0].mxu0
    %v587 = vadd.f32 0.0, %v586
    %v588 = vpop.f32.mrb[0].mxu0
    %589 = vdwg.mxu0
    %v590 = vadd.f32 %v519, %v587
    %v591 = vtanh.pop %v590
    %s592 = sadd.s32 %s198, 4
    %p593 = scmp.lt.s32.totalorder %s592, 8
    %s594 = scalar_select %p593, 1, 0
    %v595 = vstv %s594
    %vm596 = vcmp.eq.s32.totalorder %v595, 1
    %v597 = vsel %vm596, %v591, %v517
    %s598 = scalar_lea.vmem [#allocation3], 40
    %v599 = vld [vmem:[%s598] sm:$0xff]
    %600 = vmatprep.subr.mxu0 0.0
    %601 = vmatpush1.msra.mxu0 %v182
    %602 = vmatprep.subr.mxu0 0.0
    %603 = vmatpush1.msra.mxu0 %v183
    %604 = vmatprep.subr.mxu0 0.0
    %605 = vmatpush1.msra.mxu0 %v184
    %606 = vmatprep.subr.mxu0 0.0
    %607 = vmatpush1.msra.mxu0 %v185
    %608 = vmatprep.subr.mxu0 0.0
    %609 = vmatpush1.msra.mxu0 %v186
    %610 = vmatprep.subr.mxu0 0.0
    %611 = vmatpush1.msra.mxu0 %v187
    %612 = vmatprep.subr.mxu0 0.0
    %613 = vmatpush1.msra.mxu0 %v188
    %614 = vmatprep.subr.mxu0 0.0
    %615 = vmatpush1.msra.mxu0 %v189
    %616 = vmatprep.subr.mxu0 0.0
    %617 = vmatpush1.msra.mxu0 %v190
    %618 = vmatprep.subr.mxu0 0.0
    %619 = vmatpush1.msra.mxu0 %v191
    %620 = vmatprep.subr.mxu0 0.0
    %621 = vmatpush1.msra.mxu0 %v192
    %622 = vmatprep.subr.mxu0 0.0
    %623 = vmatpush1.msra.mxu0 %v193
    %624 = vmatprep.subr.mxu0 0.0
    %625 = vmatpush1.msra.mxu0 %v194
    %626 = vmatprep.subr.mxu0 0.0
    %627 = vmatpush1.msra.mxu0 %v195
    %628 = vmatprep.subr.mxu0 0.0
    %629 = vmatpush1.msra.mxu0 %v196
    %630 = vmatprep.subr.mxu0 0.0
    %631 = vmatpush1.msra.mxu0 %v197
    %632 = vmatprep.subr.mxu0 0.0
    %633 = vmatpush1.msra.mxu0 0.0
    %634 = vmatprep.subr.mxu0 0.0
    %635 = vmatpush1.msra.mxu0 0.0
    %636 = vmatprep.subr.mxu0 0.0
    %637 = vmatpush1.msra.mxu0 0.0
    %638 = vmatprep.subr.mxu0 0.0
    %639 = vmatpush1.msra.mxu0 0.0
    %640 = vmatprep.subr.mxu0 0.0
    %641 = vmatpush1.msra.mxu0 0.0
    %642 = vmatprep.subr.mxu0 0.0
    %643 = vmatpush1.msra.mxu0 0.0
    %644 = vmatprep.subr.mxu0 0.0
    %645 = vmatpush1.msra.mxu0 0.0
    %646 = vmatprep.subr.mxu0 0.0
    %647 = vmatpush1.msra.mxu0 0.0
    %648 = vmatprep.subr.mxu0 0.0
    %649 = vmatpush1.msra.mxu0 0.0
    %650 = vmatprep.subr.mxu0 0.0
    %651 = vmatpush1.msra.mxu0 0.0
    %652 = vmatprep.subr.mxu0 0.0
    %653 = vmatpush1.msra.mxu0 0.0
    %654 = vmatprep.subr.mxu0 0.0
    %655 = vmatpush1.msra.mxu0 0.0
    %656 = vmatprep.subr.mxu0 0.0
    %657 = vmatpush1.msra.mxu0 0.0
    %658 = vmatprep.subr.mxu0 0.0
    %659 = vmatpush1.msra.mxu0 0.0
    %660 = vmatprep.subr.mxu0 0.0
    %661 = vmatpush1.msra.mxu0 0.0
    %662 = vmatprep.subr.mxu0 0.0
    %663 = vmatpush1.msra.mxu0 0.0
    %664 = vmatprep.mubr.f32.mxu0 0.0
    %665 = vmatmul.mubr.f32.gmra.mrb[0].mxu0 %v597
    %v666 = vpop.f32.mrb[0].mxu0
    %v667 = vadd.f32 0.0, %v666
    %v668 = vpop.f32.mrb[0].mxu0
    %669 = vdwg.mxu0
    %v670 = vadd.f32 %v599, %v667
    %v671 = vtanh.pop %v670
    %s672 = sadd.s32 %s198, 5
    %p673 = scmp.lt.s32.totalorder %s672, 8
    %s674 = scalar_select %p673, 1, 0
    %v675 = vstv %s674
    %vm676 = vcmp.eq.s32.totalorder %v675, 1
    %v677 = vsel %vm676, %v671, %v597
    %s678 = scalar_lea.vmem [#allocation3], 48
    %v679 = vld [vmem:[%s678] sm:$0xff]
    %680 = vmatprep.subr.mxu0 0.0
    %681 = vmatpush1.msra.mxu0 %v182
    %682 = vmatprep.subr.mxu0 0.0
    %683 = vmatpush1.msra.mxu0 %v183
    %684 = vmatprep.subr.mxu0 0.0
    %685 = vmatpush1.msra.mxu0 %v184
    %686 = vmatprep.subr.mxu0 0.0
    %687 = vmatpush1.msra.mxu0 %v185
    %688 = vmatprep.subr.mxu0 0.0
    %689 = vmatpush1.msra.mxu0 %v186
    %690 = vmatprep.subr.mxu0 0.0
    %691 = vmatpush1.msra.mxu0 %v187
    %692 = vmatprep.subr.mxu0 0.0
    %693 = vmatpush1.msra.mxu0 %v188
    %694 = vmatprep.subr.mxu0 0.0
    %695 = vmatpush1.msra.mxu0 %v189
    %696 = vmatprep.subr.mxu0 0.0
    %697 = vmatpush1.msra.mxu0 %v190
    %698 = vmatprep.subr.mxu0 0.0
    %699 = vmatpush1.msra.mxu0 %v191
    %700 = vmatprep.subr.mxu0 0.0
    %701 = vmatpush1.msra.mxu0 %v192
    %702 = vmatprep.subr.mxu0 0.0
    %703 = vmatpush1.msra.mxu0 %v193
    %704 = vmatprep.subr.mxu0 0.0
    %705 = vmatpush1.msra.mxu0 %v194
    %706 = vmatprep.subr.mxu0 0.0
    %707 = vmatpush1.msra.mxu0 %v195
    %708 = vmatprep.subr.mxu0 0.0
    %709 = vmatpush1.msra.mxu0 %v196
    %710 = vmatprep.subr.mxu0 0.0
    %711 = vmatpush1.msra.mxu0 %v197
    %712 = vmatprep.subr.mxu0 0.0
    %713 = vmatpush1.msra.mxu0 0.0
    %714 = vmatprep.subr.mxu0 0.0
    %715 = vmatpush1.msra.mxu0 0.0
    %716 = vmatprep.subr.mxu0 0.0
    %717 = vmatpush1.msra.mxu0 0.0
    %718 = vmatprep.subr.mxu0 0.0
    %719 = vmatpush1.msra.mxu0 0.0
    %720 = vmatprep.subr.mxu0 0.0
    %721 = vmatpush1.msra.mxu0 0.0
    %722 = vmatprep.subr.mxu0 0.0
    %723 = vmatpush1.msra.mxu0 0.0
    %724 = vmatprep.subr.mxu0 0.0
    %725 = vmatpush1.msra.mxu0 0.0
    %726 = vmatprep.subr.mxu0 0.0
    %727 = vmatpush1.msra.mxu0 0.0
    %728 = vmatprep.subr.mxu0 0.0
    %729 = vmatpush1.msra.mxu0 0.0
    %730 = vmatprep.subr.mxu0 0.0
    %731 = vmatpush1.msra.mxu0 0.0
    %732 = vmatprep.subr.mxu0 0.0
    %733 = vmatpush1.msra.mxu0 0.0
    %734 = vmatprep.subr.mxu0 0.0
    %735 = vmatpush1.msra.mxu0 0.0
    %736 = vmatprep.subr.mxu0 0.0
    %737 = vmatpush1.msra.mxu0 0.0
    %738 = vmatprep.subr.mxu0 0.0
    %739 = vmatpush1.msra.mxu0 0.0
    %740 = vmatprep.subr.mxu0 0.0
    %741 = vmatpush1.msra.mxu0 0.0
    %742 = vmatprep.subr.mxu0 0.0
    %743 = vmatpush1.msra.mxu0 0.0
    %744 = vmatprep.mubr.f32.mxu0 0.0
    %745 = vmatmul.mubr.f32.gmra.mrb[0].mxu0 %v677
    %v746 = vpop.f32.mrb[0].mxu0
    %v747 = vadd.f32 0.0, %v746
    %v748 = vpop.f32.mrb[0].mxu0
    %749 = vdwg.mxu0
    %v750 = vadd.f32 %v679, %v747
    %v751 = vtanh.pop %v750
    %s752 = sadd.s32 %s198, 6
    %p753 = scmp.lt.s32.totalorder %s752, 8
    %s754 = scalar_select %p753, 1, 0
    %v755 = vstv %s754
    %vm756 = vcmp.eq.s32.totalorder %v755, 1
    %v757 = vsel %vm756, %v751, %v677
    %s758 = scalar_lea.vmem [#allocation3], 56
    %v759 = vld [vmem:[%s758] sm:$0xff]
    %760 = vmatprep.subr.mxu0 0.0
    %761 = vmatpush1.msra.mxu0 %v182
    %762 = vmatprep.subr.mxu0 0.0
    %763 = vmatpush1.msra.mxu0 %v183
    %764 = vmatprep.subr.mxu0 0.0
    %765 = vmatpush1.msra.mxu0 %v184
    %766 = vmatprep.subr.mxu0 0.0
    %767 = vmatpush1.msra.mxu0 %v185
    %768 = vmatprep.subr.mxu0 0.0
    %769 = vmatpush1.msra.mxu0 %v186
    %770 = vmatprep.subr.mxu0 0.0
    %771 = vmatpush1.msra.mxu0 %v187
    %772 = vmatprep.subr.mxu0 0.0
    %773 = vmatpush1.msra.mxu0 %v188
    %774 = vmatprep.subr.mxu0 0.0
    %775 = vmatpush1.msra.mxu0 %v189
    %776 = vmatprep.subr.mxu0 0.0
    %777 = vmatpush1.msra.mxu0 %v190
    %778 = vmatprep.subr.mxu0 0.0
    %779 = vmatpush1.msra.mxu0 %v191
    %780 = vmatprep.subr.mxu0 0.0
    %781 = vmatpush1.msra.mxu0 %v192
    %782 = vmatprep.subr.mxu0 0.0
    %783 = vmatpush1.msra.mxu0 %v193
    %784 = vmatprep.subr.mxu0 0.0
    %785 = vmatpush1.msra.mxu0 %v194
    %786 = vmatprep.subr.mxu0 0.0
    %787 = vmatpush1.msra.mxu0 %v195
    %788 = vmatprep.subr.mxu0 0.0
    %789 = vmatpush1.msra.mxu0 %v196
    %790 = vmatprep.subr.mxu0 0.0
    %791 = vmatpush1.msra.mxu0 %v197
    %792 = vmatprep.subr.mxu0 0.0
    %793 = vmatpush1.msra.mxu0 0.0
    %794 = vmatprep.subr.mxu0 0.0
    %795 = vmatpush1.msra.mxu0 0.0
    %796 = vmatprep.subr.mxu0 0.0
    %797 = vmatpush1.msra.mxu0 0.0
    %798 = vmatprep.subr.mxu0 0.0
    %799 = vmatpush1.msra.mxu0 0.0
    %800 = vmatprep.subr.mxu0 0.0
    %801 = vmatpush1.msra.mxu0 0.0
    %802 = vmatprep.subr.mxu0 0.0
    %803 = vmatpush1.msra.mxu0 0.0
    %804 = vmatprep.subr.mxu0 0.0
    %805 = vmatpush1.msra.mxu0 0.0
    %806 = vmatprep.subr.mxu0 0.0
    %807 = vmatpush1.msra.mxu0 0.0
    %808 = vmatprep.subr.mxu0 0.0
    %809 = vmatpush1.msra.mxu0 0.0
    %810 = vmatprep.subr.mxu0 0.0
    %811 = vmatpush1.msra.mxu0 0.0
    %812 = vmatprep.subr.mxu0 0.0
    %813 = vmatpush1.msra.mxu0 0.0
    %814 = vmatprep.subr.mxu0 0.0
    %815 = vmatpush1.msra.mxu0 0.0
    %816 = vmatprep.subr.mxu0 0.0
    %817 = vmatpush1.msra.mxu0 0.0
    %818 = vmatprep.subr.mxu0 0.0
    %819 = vmatpush1.msra.mxu0 0.0
    %820 = vmatprep.subr.mxu0 0.0
    %821 = vmatpush1.msra.mxu0 0.0
    %822 = vmatprep.subr.mxu0 0.0
    %823 = vmatpush1.msra.mxu0 0.0
    %824 = vmatprep.mubr.f32.mxu0 0.0
    %825 = vmatmul.mubr.f32.gmra.mrb[0].mxu0 %v757
    %v826 = vpop.f32.mrb[0].mxu0
    %v827 = vadd.f32 0.0, %v826
    %v828 = vpop.f32.mrb[0].mxu0
    %829 = vdwg.mxu0
    %v830 = vadd.f32 %v759, %v827
    %v831 = vtanh.pop %v830
    %s832 = sadd.s32 %s198, 7
    %p833 = scmp.lt.s32.totalorder %s832, 8
    %s834 = scalar_select %p833, 1, 0
    %v835 = vstv %s834
    %vm836 = vcmp.eq.s32.totalorder %v835, 1
    %v837 = vsel %vm836, %v831, %v757
    %838 = vst [vmem:[#allocation2] sm:$0xff] %v837
    // Predicated region
    $region22: #{tpu_custom_call.1} parent=1 // pred_check
      %p839 = pneg %p29
    $region23: #{tpu_custom_call.1} parent=1 // pred_check_branch
      %841 = sbr.rel (%p839) target = $region25
    $region24: #{tpu_custom_call.1} parent=1 // pred_region
      %842 = vst [vmem:[#allocation7] sm:$0xff] %v837
    $region25: #{tpu_custom_call.1} parent=1 // pred_fallthru
      _
    // Predicated region
    $region26: #{tpu_custom_call.1} parent=1 // pred_check
      _
    $region27: #{tpu_custom_call.1} parent=1 // pred_check_branch
      %844 = sbr.rel (0) target = $region29
    $region28: #{tpu_custom_call.1} parent=1 // pred_region
      %s846 = ssub.s32 128, 128
      %847 = vsyncadd [#allocation6], %s846
      %s849 = sshll.u32 [#allocation7], 4
      %s850 = int_to_ptr.vmem [resolvable:$true] %s849
      %852 = dma.vmem_to_hbm [thread:$0]  %s850, 128, %s3, [#allocation6]
    $region29: #{tpu_custom_call.1} parent=1 // pred_fallthru
      _
    // Predicated region
    $region30: #{tpu_custom_call.1} parent=1 // pred_check
      _
    $region31: #{tpu_custom_call.1} parent=1 // pred_check_branch
      %854 = sbr.rel (0) target = $region33
    $region32: #{tpu_custom_call.1} parent=1 // pred_region
      %855 = dma.done [#allocation6], 128
    $region33: #{tpu_custom_call.1} parent=1 // pred_fallthru
      _
    %856 = vsyncpa [#allocation5], 1
    %857 = vsyncpa [#allocation6], 1

</llo_original>
